<compile_context>
chip_gen: v6e
topology: v6e:2x2x1
jax: 0.10.0
libtpu: 0.0.40
codegen_flags: <defaults>
</compile_context>

<pallas_src>
import jax
import jax.numpy as jnp
from jax.experimental import pallas as pl
from jax.experimental.pallas import tpu as pltpu

EPS = 1e-5  # BatchNorm eps (PyTorch default)


# ------------------------------- kernel --------------------------------------
def asp_kernel(
    x_ref,       # (C1, Bb*T)   channel-major, batch folded into lanes
    ik_ref,      # (Bb*T, Bb)   block-indicator (segmented sums over T)
    ikt_ref,     # (Bb, Bb*T)   transposed indicator (broadcast over T)
    w1x_ref,     # (Cm, C1)
    w1stat_ref,  # (Cm, 2*C1)   = [w1mu | w1sg]
    b12_ref,     # (Cm + C1, 1) = [b1 ; b2_folded]
    w2_ref,      # (C1, Cm)     BN1 folded in
    w3_ref,      # (2*C1, out_pad)  attn_norm + out_norm folded in, lane-padded
    b3_ref,      # (1, out_pad)
    out_ref,     # (1, Bb, out_pad)
):
    C1, N = x_ref.shape
    Bb = ik_ref.shape[1]
    T = N // Bb
    Cm = w1x_ref.shape[0]
    inv_t = 1.0 / T
    inv_tm1 = 1.0 / (T - 1)
    f32 = jnp.float32

    x = x_ref[...]                         # (C1, N)
    ik = ik_ref[...]                       # (N, Bb)
    ikt = ikt_ref[...]                     # (Bb, N)
    b1 = b12_ref[0:Cm, :]                  # (Cm, 1)
    b2 = b12_ref[Cm:Cm + C1, :]            # (C1, 1)

    # ---- statistic pooling: raw moments via segmented sums on the MXU -------
    xsq = x * x
    s1 = jnp.dot(x, ik, preferred_element_type=f32)        # (C1, Bb) sum_t x
    s2 = jnp.dot(xsq, ik, preferred_element_type=f32)      # (C1, Bb) sum_t x^2
    mu = s1 * inv_t
    sg = jnp.sqrt(jnp.maximum(s2 - mu * s1, 0.0) * inv_tm1)  # unbiased std

    # ---- attention MLP (no (3C1,T) concat; stat term as one merged matmul) --
    musg = jnp.concatenate([mu, sg], axis=0)                # (2*C1, Bb)
    c = jnp.dot(w1stat_ref[...], musg, preferred_element_type=f32) + b1  # (Cm, Bb)
    h = (jnp.dot(w1x_ref[...], x, preferred_element_type=f32)
         + jnp.dot(c, ikt, preferred_element_type=f32))     # broadcast over T
    h = jnp.maximum(h, 0.0)                                 # (Cm, N)
    a = jnp.dot(w2_ref[...], h, preferred_element_type=f32) + b2  # (C1, N)

    # ---- softmax over T per sample (dropout = identity in eval) -------------
    # Per-row max is constant within each T-segment => softmax per segment is
    # exact; stable unless per-channel score spread across samples is ~>80.
    p = jnp.exp(a - jnp.max(a, axis=-1, keepdims=True))     # (C1, N)
    denom = jnp.dot(p, ik, preferred_element_type=f32)      # (C1, Bb)
    inv = pl.reciprocal(denom)                               # exact, tiny tile

    # ---- attentive mean / std (normalize after the segmented sums) ----------
    amu = jnp.dot(x * p, ik, preferred_element_type=f32) * inv          # (C1, Bb)
    asg = jnp.sqrt(jnp.maximum(
        jnp.dot(xsq * p, ik, preferred_element_type=f32) * inv - amu * amu, 1e-4))

    # ---- folded attn_norm -> out_proj -> out_norm: one dense, lane-padded ----
    pool = jnp.transpose(jnp.concatenate([amu, asg], axis=0))  # (Bb, 2*C1)
    out = jnp.dot(pool, w3_ref[...], preferred_element_type=f32) + b3_ref[...]
    out_ref[...] = out.reshape(out_ref.shape)


# ------------------------- host-side BN folding -------------------------------
def fold_params(p, out_dim):
    """Fold eval-mode BatchNorms into adjacent weights; split/pack/pad params."""
    Cm, three_c1 = p["w1"].shape
    C1 = three_c1 // 3

    # BN1 (after ReLU) folded into conv2.
    scale1 = p["g1"] * jax.lax.rsqrt(p["rv1"] + EPS)                   # (Cm, 1)
    w2f = p["w2"] * scale1.reshape(1, Cm)                              # (C1, Cm)
    b2f = p["b2"] + p["w2"] @ (p["be1"] - p["rm1"] * scale1)           # (C1, 1)

    # attn_norm (BN2) and out_norm (BN3) folded into out_proj.
    scale2 = p["g2"] * jax.lax.rsqrt(p["rv2"] + EPS)                   # (1, 2C1)
    scale3 = p["g3"] * jax.lax.rsqrt(p["rv3"] + EPS)                   # (1, out)
    w3f = (scale2.reshape(-1, 1) * p["w3t"]) * scale3                  # (2C1, out)
    b3f = ((p["b3"] + (p["be2"] - p["rm2"] * scale2) @ p["w3t"])
           - p["rm3"]) * scale3 + p["be3"]                             # (1, out)

    # Split conv1 weights so the (3C1, T) stat concat is never built;
    # the mu/sg halves stay merged as one (Cm, 2C1) weight.
    w1x = p["w1"][:, :C1]                                              # (Cm, C1)
    w1stat = p["w1"][:, C1:]                                           # (Cm, 2C1)

    # Pack the two column biases into one input.
    b12 = jnp.concatenate([p["b1"], b2f], axis=0)                      # (Cm+C1, 1)

    # Lane-dense (>=128) output slab: pad out_proj columns with zeros.
    out_pad = ((out_dim + 127) // 128) * 128
    w3f_pad = jnp.zeros((2 * C1, out_pad), jnp.float32).at[:, :out_dim].set(w3f)
    b3f_pad = jnp.zeros((1, out_pad), jnp.float32).at[:, :out_dim].set(b3f)
    return w1x, w1stat, b12, w2f, w3f_pad, b3f_pad, out_pad


# --------------------------- blocking heuristics -------------------------------
def _device_is_dual_tensorcore():
    try:
        kind = jax.devices()[0].device_kind.lower()
    except Exception:
        return False
    return "v7" in kind   # v7x has 2 TensorCores; v5e/v6e have 1


def _pick_block_b(B, C1, Cm, T, dual_tc):
    # Rough VMEM for the (C1-or-Cm, block_b*T) f32 tiles live at once
    # (x double-buffered, x*x, x*p, xsq*p, h, a/p, c-broadcast).
    per_sample_bytes = (6 * C1 + 3 * Cm) * T * 4
    budget = (40 if dual_tc else 80) << 20      # v7x: 64 MiB physical; others 128
    cap = max(1, budget // max(per_sample_bytes, 1))
    cands = [d for d in range(1, B + 1)
             if B % d == 0 and d <= cap and (d == B or (d * T) % 128 == 0)]
    if not cands:
        return B
    if dual_tc:
        even = [d for d in cands if (B // d) % 2 == 0]   # keep both cores busy
        if even:
            return max(even)
    return max(cands)                                     # single step if possible


# ------------------------------- wrapper --------------------------------------
def attentive_statistic_pool(x, params, out_dim, block_b=None):
    """x: (B, C1, T) float32 -> (B, out_dim) float32 (eval mode, mask=None)."""
    B, C1, T = x.shape
    w1x, w1stat, b12, w2f, w3f, b3f, out_pad = fold_params(params, out_dim)
    Cm = w1x.shape[0]

    dual_tc = _device_is_dual_tensorcore()
    if block_b is None:
        block_b = _pick_block_b(B, C1, Cm, T, dual_tc)
    assert B % block_b == 0, "B must be divisible by block_b"
    n_steps = B // block_b
    N = block_b * T

    # Channel-major with the batch folded into the matmul N dimension.
    x_cm = jnp.transpose(x, (1, 0, 2)).reshape(C1, B * T)

    # Block-indicator matrices for segmented per-sample reductions / broadcasts.
    seg = jnp.arange(N, dtype=jnp.int32) // T
    ik = (seg[:, None] == jnp.arange(block_b, dtype=jnp.int32)[None, :]
          ).astype(jnp.float32)                                        # (N, Bb)
    ikt = ik.T                                                         # (Bb, N)

    vmem_limit = (48 if dual_tc else 64) << 20

    out3 = pl.pallas_call(
        asp_kernel,
        out_shape=jax.ShapeDtypeStruct((n_steps, block_b, out_pad), jnp.float32),
        grid=(n_steps,),
        in_specs=[
            pl.BlockSpec((C1, N), lambda i: (0, i)),
            pl.BlockSpec(ik.shape, lambda i: (0, 0)),
            pl.BlockSpec(ikt.shape, lambda i: (0, 0)),
            pl.BlockSpec(w1x.shape, lambda i: (0, 0)),
            pl.BlockSpec(w1stat.shape, lambda i: (0, 0)),
            pl.BlockSpec(b12.shape, lambda i: (0, 0)),
            pl.BlockSpec(w2f.shape, lambda i: (0, 0)),
            pl.BlockSpec(w3f.shape, lambda i: (0, 0)),
            pl.BlockSpec(b3f.shape, lambda i: (0, 0)),
        ],
        out_specs=pl.BlockSpec((1, block_b, out_pad), lambda i: (i, 0, 0)),
        compiler_params=pltpu.CompilerParams(
            dimension_semantics=("parallel",),
            vmem_limit_bytes=vmem_limit),
    )(x_cm, ik, ikt, w1x, w1stat, b12, w2f, w3f, b3f)
    return out3.reshape(B, out_pad)[:, :out_dim]


# ----------------------------- parameter init ---------------------------------
def init_params(key, in_dim, out_dim):
    c_mid = in_dim // 2
    ks = iter(jax.random.split(key, 32))
    nrm = lambda shape, s=0.1: (jax.random.normal(next(ks), shape) * s).astype(jnp.float32)
    pos = lambda shape: jax.random.uniform(next(ks), shape, minval=0.5,
                                           maxval=1.5).astype(jnp.float32)
    return {
        # attention[0]: Conv1d(3*in_dim -> in_dim//2, k=1)
        "w1": nrm((c_mid, 3 * in_dim)),
        "b1": nrm((c_mid, 1)),
        # attention[2]: BatchNorm1d(in_dim//2)
        "g1": pos((c_mid, 1)), "be1": nrm((c_mid, 1)),
        "rm1": nrm((c_mid, 1)), "rv1": pos((c_mid, 1)),
        # attention[3]: Conv1d(in_dim//2 -> in_dim, k=1)
        "w2": nrm((in_dim, c_mid)),
        "b2": nrm((in_dim, 1)),
        # attn_norm: BatchNorm1d(2*in_dim)
        "g2": pos((1, 2 * in_dim)), "be2": nrm((1, 2 * in_dim)),
        "rm2": nrm((1, 2 * in_dim)), "rv2": pos((1, 2 * in_dim)),
        # out_proj: Linear(2*in_dim -> out_dim); stored transposed (in, out)
        "w3t": nrm((2 * in_dim, out_dim)),
        "b3": nrm((1, out_dim)),
        # out_norm: BatchNorm1d(out_dim)
        "g3": pos((1, out_dim)), "be3": nrm((1, out_dim)),
        "rm3": pos((1, out_dim)) * 0.0 + nrm((1, out_dim)), "rv3": pos((1, out_dim)),
    }


# ----------------------------- pure-JAX reference ------------------------------
def reference(x, p):
    T = x.shape[-1]
    mu = jnp.mean(x, axis=-1, keepdims=True)
    sg = jnp.sqrt(jnp.sum((x - mu) ** 2, axis=-1, keepdims=True) / (T - 1))
    stat = jnp.concatenate(
        [x, jnp.broadcast_to(mu, x.shape), jnp.broadcast_to(sg, x.shape)], axis=1)
    h = jnp.einsum("oc,bct->bot", p["w1"], stat) + p["b1"][None]
    h = jnp.maximum(h, 0.0)
    h = (h - p["rm1"][None]) * p["g1"][None] / jnp.sqrt(p["rv1"][None] + EPS) \
        + p["be1"][None]
    a = jnp.einsum("oc,bct->bot", p["w2"], h) + p["b2"][None]
    a = jax.nn.softmax(a, axis=-1)
    amu = jnp.sum(x * a, axis=-1)
    asg = jnp.sqrt(jnp.maximum(jnp.sum(x * x * a, axis=-1) - amu ** 2, 1e-4))
    pool = jnp.concatenate([amu, asg], axis=1)
    pool = (pool - p["rm2"]) * p["g2"] / jnp.sqrt(p["rv2"] + EPS) + p["be2"]
    out = pool @ p["w3t"] + p["b3"]
    out = (out - p["rm3"]) * p["g3"] / jnp.sqrt(p["rv3"] + EPS) + p["be3"]
    return out


if __name__ == "__main__":
    # TODO(synk): masked-statistics branch (mask != None) and training-mode
    # BatchNorm/dropout are not implemented (eval-mode forward only).
    B, in_dim, T, out_dim = 4, 16, 128, 32   # n_heads unused in the forward pass
    key = jax.random.PRNGKey(0)
    kx, kp = jax.random.split(key)
    x = jax.random.normal(kx, (B, in_dim, T), dtype=jnp.float32)
    params = init_params(kp, in_dim, out_dim)

    y = attentive_statistic_pool(x, params, out_dim)
    y = jax.block_until_ready(y)

    y_ref = jax.block_until_ready(reference(x, params))
    assert y.shape == (B, out_dim)
    # tolerance covers host-side BN folding / raw-moment variance reassociation
    assert jnp.allclose(y, y_ref, rtol=2e-3, atol=2e-3), \
        f"max abs diff {jnp.max(jnp.abs(y - y_ref))}"
    print("KERNEL_OK")
</pallas_src>

<mosaic_0001>
module attributes {stable_mosaic.version = 11 : i64} {
  func.func @asp_kernel(%arg0: i32, %arg1: memref<16x512xf32, #tpu.memory_space<vmem>>, %arg2: memref<512x4xf32, #tpu.memory_space<vmem>>, %arg3: memref<4x512xf32, #tpu.memory_space<vmem>>, %arg4: memref<8x16xf32, #tpu.memory_space<vmem>>, %arg5: memref<8x32xf32, #tpu.memory_space<vmem>>, %arg6: memref<24x1xf32, #tpu.memory_space<vmem>>, %arg7: memref<16x8xf32, #tpu.memory_space<vmem>>, %arg8: memref<32x128xf32, #tpu.memory_space<vmem>>, %arg9: memref<1x128xf32, #tpu.memory_space<vmem>>, %arg10: memref<1x4x128xf32, #tpu.memory_space<vmem>>) attributes {dimension_semantics = [#tpu.dimension_semantics<parallel>], iteration_bounds = array<i64: 1>, scalar_prefetch = 0 : i64, scratch_operands = 0 : i64, tpu.core_type = #tpu.core_type<tc>, window_params = [{transform_indices = @transform_0, window_bounds = array<i64: 16, 512>}, {pipeline_mode = #tpu.pipeline_mode<synchronous>, transform_indices = @transform_1, window_bounds = array<i64: 512, 4>}, {pipeline_mode = #tpu.pipeline_mode<synchronous>, transform_indices = @transform_2, window_bounds = array<i64: 4, 512>}, {pipeline_mode = #tpu.pipeline_mode<synchronous>, transform_indices = @transform_3, window_bounds = array<i64: 8, 16>}, {pipeline_mode = #tpu.pipeline_mode<synchronous>, transform_indices = @transform_4, window_bounds = array<i64: 8, 32>}, {pipeline_mode = #tpu.pipeline_mode<synchronous>, transform_indices = @transform_5, window_bounds = array<i64: 24, 1>}, {pipeline_mode = #tpu.pipeline_mode<synchronous>, transform_indices = @transform_6, window_bounds = array<i64: 16, 8>}, {pipeline_mode = #tpu.pipeline_mode<synchronous>, transform_indices = @transform_7, window_bounds = array<i64: 32, 128>}, {pipeline_mode = #tpu.pipeline_mode<synchronous>, transform_indices = @transform_8, window_bounds = array<i64: 1, 128>}, {transform_indices = @transform_9, window_bounds = array<i64: 1, 4, 128>}]} {
    %c0 = arith.constant 0 : index
    %c0_0 = arith.constant 0 : index
    %0 = vector.load %arg1[%c0, %c0_0] : memref<16x512xf32, #tpu.memory_space<vmem>>, vector<16x512xf32>
    %c0_1 = arith.constant 0 : index
    %c0_2 = arith.constant 0 : index
    %1 = vector.load %arg2[%c0_1, %c0_2] : memref<512x4xf32, #tpu.memory_space<vmem>>, vector<512x4xf32>
    %c0_3 = arith.constant 0 : index
    %c0_4 = arith.constant 0 : index
    %2 = vector.load %arg3[%c0_3, %c0_4] : memref<4x512xf32, #tpu.memory_space<vmem>>, vector<4x512xf32>
    %c0_5 = arith.constant 0 : index
    %c0_6 = arith.constant 0 : index
    %3 = vector.load %arg6[%c0_5, %c0_6] : memref<24x1xf32, #tpu.memory_space<vmem>>, vector<8x1xf32>
    %c8 = arith.constant 8 : index
    %c0_7 = arith.constant 0 : index
    %4 = vector.load %arg6[%c8, %c0_7] : memref<24x1xf32, #tpu.memory_space<vmem>>, vector<16x1xf32>
    %5 = arith.mulf %0, %0 : vector<16x512xf32>
    %cst = arith.constant dense<0.000000e+00> : vector<16x4xf32>
    %6 = tpu.matmul %0, %1, %cst {dimension_numbers = #tpu.dot_dimension_numbers<[1], [0], [0], [1], [0, 0, 1, 1], [], []>} : vector<16x512xf32>, vector<512x4xf32>, vector<16x4xf32> -> vector<16x4xf32>
    %cst_8 = arith.constant dense<0.000000e+00> : vector<16x4xf32>
    %7 = tpu.matmul %5, %1, %cst_8 {dimension_numbers = #tpu.dot_dimension_numbers<[1], [0], [0], [1], [0, 0, 1, 1], [], []>} : vector<16x512xf32>, vector<512x4xf32>, vector<16x4xf32> -> vector<16x4xf32>
    %cst_9 = arith.constant 7.812500e-03 : f32
    %8 = vector.broadcast %cst_9 : f32 to vector<16x4xf32>
    %9 = arith.mulf %6, %8 : vector<16x4xf32>
    %10 = arith.mulf %9, %6 : vector<16x4xf32>
    %11 = arith.subf %7, %10 : vector<16x4xf32>
    %cst_10 = arith.constant 0.000000e+00 : f32
    %12 = vector.broadcast %cst_10 : f32 to vector<16x4xf32>
    %13 = arith.maximumf %11, %12 : vector<16x4xf32>
    %cst_11 = arith.constant 0.00787401571 : f32
    %14 = vector.broadcast %cst_11 : f32 to vector<16x4xf32>
    %15 = arith.mulf %13, %14 : vector<16x4xf32>
    %16 = math.sqrt %15 : vector<16x4xf32>
    %17 = tpu.concatenate %9, %16 in 0 : vector<16x4xf32>, vector<16x4xf32> -> vector<32x4xf32>
    %c0_12 = arith.constant 0 : index
    %c0_13 = arith.constant 0 : index
    %18 = vector.load %arg5[%c0_12, %c0_13] : memref<8x32xf32, #tpu.memory_space<vmem>>, vector<8x32xf32>
    %cst_14 = arith.constant dense<0.000000e+00> : vector<8x4xf32>
    %19 = tpu.matmul %18, %17, %cst_14 {dimension_numbers = #tpu.dot_dimension_numbers<[1], [0], [0], [1], [0, 0, 1, 1], [], []>} : vector<8x32xf32>, vector<32x4xf32>, vector<8x4xf32> -> vector<8x4xf32>
    %20 = vector.broadcast %3 : vector<8x1xf32> to vector<8x4xf32>
    %21 = arith.addf %19, %20 : vector<8x4xf32>
    %c0_15 = arith.constant 0 : index
    %c0_16 = arith.constant 0 : index
    %22 = vector.load %arg4[%c0_15, %c0_16] : memref<8x16xf32, #tpu.memory_space<vmem>>, vector<8x16xf32>
    %cst_17 = arith.constant dense<0.000000e+00> : vector<8x512xf32>
    %23 = tpu.matmul %22, %0, %cst_17 {dimension_numbers = #tpu.dot_dimension_numbers<[1], [0], [0], [1], [0, 0, 1, 1], [], []>} : vector<8x16xf32>, vector<16x512xf32>, vector<8x512xf32> -> vector<8x512xf32>
    %cst_18 = arith.constant dense<0.000000e+00> : vector<8x512xf32>
    %24 = tpu.matmul %21, %2, %cst_18 {dimension_numbers = #tpu.dot_dimension_numbers<[1], [0], [0], [1], [0, 0, 1, 1], [], []>} : vector<8x4xf32>, vector<4x512xf32>, vector<8x512xf32> -> vector<8x512xf32>
    %25 = arith.addf %23, %24 : vector<8x512xf32>
    %cst_19 = arith.constant 0.000000e+00 : f32
    %26 = vector.broadcast %cst_19 : f32 to vector<8x512xf32>
    %27 = arith.maximumf %25, %26 : vector<8x512xf32>
    %c0_20 = arith.constant 0 : index
    %c0_21 = arith.constant 0 : index
    %28 = vector.load %arg7[%c0_20, %c0_21] : memref<16x8xf32, #tpu.memory_space<vmem>>, vector<16x8xf32>
    %cst_22 = arith.constant dense<0.000000e+00> : vector<16x512xf32>
    %29 = tpu.matmul %28, %27, %cst_22 {dimension_numbers = #tpu.dot_dimension_numbers<[1], [0], [0], [1], [0, 0, 1, 1], [], []>} : vector<16x8xf32>, vector<8x512xf32>, vector<16x512xf32> -> vector<16x512xf32>
    %30 = vector.broadcast %4 : vector<16x1xf32> to vector<16x512xf32>
    %31 = arith.addf %29, %30 : vector<16x512xf32>
    %cst_23 = arith.constant dense<0xFF800000> : vector<16xf32>
    %32 = vector.multi_reduction <maximumf>, %31, %cst_23 [1] : vector<16x512xf32> to vector<16xf32>
    %33 = vector.shape_cast %32 : vector<16xf32> to vector<16x1xf32>
    %34 = vector.broadcast %33 : vector<16x1xf32> to vector<16x512xf32>
    %35 = arith.subf %31, %34 : vector<16x512xf32>
    %36 = math.exp %35 : vector<16x512xf32>
    %cst_24 = arith.constant dense<0.000000e+00> : vector<16x4xf32>
    %37 = tpu.matmul %36, %1, %cst_24 {dimension_numbers = #tpu.dot_dimension_numbers<[1], [0], [0], [1], [0, 0, 1, 1], [], []>} : vector<16x512xf32>, vector<512x4xf32>, vector<16x4xf32> -> vector<16x4xf32>
    %38 = tpu.reciprocal %37 : vector<16x4xf32> -> vector<16x4xf32>
    %39 = arith.mulf %0, %36 : vector<16x512xf32>
    %cst_25 = arith.constant dense<0.000000e+00> : vector<16x4xf32>
    %40 = tpu.matmul %39, %1, %cst_25 {dimension_numbers = #tpu.dot_dimension_numbers<[1], [0], [0], [1], [0, 0, 1, 1], [], []>} : vector<16x512xf32>, vector<512x4xf32>, vector<16x4xf32> -> vector<16x4xf32>
    %41 = arith.mulf %40, %38 : vector<16x4xf32>
    %42 = arith.mulf %5, %36 : vector<16x512xf32>
    %cst_26 = arith.constant dense<0.000000e+00> : vector<16x4xf32>
    %43 = tpu.matmul %42, %1, %cst_26 {dimension_numbers = #tpu.dot_dimension_numbers<[1], [0], [0], [1], [0, 0, 1, 1], [], []>} : vector<16x512xf32>, vector<512x4xf32>, vector<16x4xf32> -> vector<16x4xf32>
    %44 = arith.mulf %43, %38 : vector<16x4xf32>
    %45 = arith.mulf %41, %41 : vector<16x4xf32>
    %46 = arith.subf %44, %45 : vector<16x4xf32>
    %cst_27 = arith.constant 9.99999974E-5 : f32
    %47 = vector.broadcast %cst_27 : f32 to vector<16x4xf32>
    %48 = arith.maximumf %46, %47 : vector<16x4xf32>
    %49 = math.sqrt %48 : vector<16x4xf32>
    %50 = tpu.concatenate %41, %49 in 0 : vector<16x4xf32>, vector<16x4xf32> -> vector<32x4xf32>
    %51 = tpu.transpose %50, [1, 0] : vector<32x4xf32> -> vector<4x32xf32>
    %c0_28 = arith.constant 0 : index
    %c0_29 = arith.constant 0 : index
    %52 = vector.load %arg8[%c0_28, %c0_29] : memref<32x128xf32, #tpu.memory_space<vmem>>, vector<32x128xf32>
    %cst_30 = arith.constant dense<0.000000e+00> : vector<4x128xf32>
    %53 = tpu.matmul %51, %52, %cst_30 {dimension_numbers = #tpu.dot_dimension_numbers<[1], [0], [0], [1], [0, 0, 1, 1], [], []>} : vector<4x32xf32>, vector<32x128xf32>, vector<4x128xf32> -> vector<4x128xf32>
    %c0_31 = arith.constant 0 : index
    %c0_32 = arith.constant 0 : index
    %54 = vector.load %arg9[%c0_31, %c0_32] : memref<1x128xf32, #tpu.memory_space<vmem>>, vector<1x128xf32>
    %55 = vector.broadcast %54 : vector<1x128xf32> to vector<4x128xf32>
    %56 = arith.addf %53, %55 : vector<4x128xf32>
    %57 = vector.shape_cast %56 : vector<4x128xf32> to vector<1x4x128xf32>
    %c0_33 = arith.constant 0 : index
    %c0_34 = arith.constant 0 : index
    %c0_35 = arith.constant 0 : index
    %58 = vector.load %arg10[%c0_33, %c0_34, %c0_35] : memref<1x4x128xf32, #tpu.memory_space<vmem>>, vector<1x4x128xf32>
    tpu.vector_store %arg10[%c0_33, %c0_34, %c0_35], %57 {strides = array<i32>} : memref<1x4x128xf32, #tpu.memory_space<vmem>>, vector<1x4x128xf32>,
    return
  }
  func.func @transform_0(%arg0: i32) -> (i32, i32) {
    %c0_i32 = arith.constant 0 : i32
    %c0_i32_0 = arith.constant 0 : i32
    return %c0_i32, %arg0 : i32, i32
  }
  func.func @transform_1(%arg0: i32) -> (i32, i32) {
    %c0_i32 = arith.constant 0 : i32
    %c0_i32_0 = arith.constant 0 : i32
    %c0_i32_1 = arith.constant 0 : i32
    return %c0_i32, %c0_i32_0 : i32, i32
  }
  func.func @transform_2(%arg0: i32) -> (i32, i32) {
    %c0_i32 = arith.constant 0 : i32
    %c0_i32_0 = arith.constant 0 : i32
    %c0_i32_1 = arith.constant 0 : i32
    return %c0_i32, %c0_i32_0 : i32, i32
  }
  func.func @transform_3(%arg0: i32) -> (i32, i32) {
    %c0_i32 = arith.constant 0 : i32
    %c0_i32_0 = arith.constant 0 : i32
    %c0_i32_1 = arith.constant 0 : i32
    return %c0_i32, %c0_i32_0 : i32, i32
  }
  func.func @transform_4(%arg0: i32) -> (i32, i32) {
    %c0_i32 = arith.constant 0 : i32
    %c0_i32_0 = arith.constant 0 : i32
    %c0_i32_1 = arith.constant 0 : i32
    return %c0_i32, %c0_i32_0 : i32, i32
  }
  func.func @transform_5(%arg0: i32) -> (i32, i32) {
    %c0_i32 = arith.constant 0 : i32
    %c0_i32_0 = arith.constant 0 : i32
    %c0_i32_1 = arith.constant 0 : i32
    return %c0_i32, %c0_i32_0 : i32, i32
  }
  func.func @transform_6(%arg0: i32) -> (i32, i32) {
    %c0_i32 = arith.constant 0 : i32
    %c0_i32_0 = arith.constant 0 : i32
    %c0_i32_1 = arith.constant 0 : i32
    return %c0_i32, %c0_i32_0 : i32, i32
  }
  func.func @transform_7(%arg0: i32) -> (i32, i32) {
    %c0_i32 = arith.constant 0 : i32
    %c0_i32_0 = arith.constant 0 : i32
    %c0_i32_1 = arith.constant 0 : i32
    return %c0_i32, %c0_i32_0 : i32, i32
  }
  func.func @transform_8(%arg0: i32) -> (i32, i32) {
    %c0_i32 = arith.constant 0 : i32
    %c0_i32_0 = arith.constant 0 : i32
    %c0_i32_1 = arith.constant 0 : i32
    return %c0_i32, %c0_i32_0 : i32, i32
  }
  func.func @transform_9(%arg0: i32) -> (i32, i32, i32) {
    %c0_i32 = arith.constant 0 : i32
    %c0_i32_0 = arith.constant 0 : i32
    %c0_i32_1 = arith.constant 0 : i32
    return %arg0, %c0_i32, %c0_i32_0 : i32, i32, i32
  }
}

</mosaic_0001>

<llo_original>
// kernel: tpu_custom_call.1
$region0: #{tpu_custom_call.1}
  #allocation0 [shape = 'u32[]', space=smem, size = 0x4, offset = 0x4, fixed_abs, tag = 'smem constant byte address 0x4 - core index']
  #allocation1 [shape = 'u32[144,128]{1,0:T(1,128)}', space=vmem, size = 0x12000, scoped, tag = 'internal scratch']
  %s0 = inlined_call_operand.vmem [shape: f32[16,512], index: 0, kind: input, shape index: {}]
  %s1 = inlined_call_operand.vmem [shape: f32[512,4], index: 1, kind: input, shape index: {}]
  %s2 = inlined_call_operand.vmem [shape: f32[4,512], index: 2, kind: input, shape index: {}]
  %s3 = inlined_call_operand.vmem [shape: f32[8,16], index: 3, kind: input, shape index: {}]
  %s4 = inlined_call_operand.vmem [shape: f32[8,32], index: 4, kind: input, shape index: {}]
  %s5 = inlined_call_operand.vmem [shape: f32[24,1], index: 5, kind: input, shape index: {}]
  %s6 = inlined_call_operand.vmem [shape: f32[16,8], index: 6, kind: input, shape index: {}]
  %s7 = inlined_call_operand.vmem [shape: f32[32,128], index: 7, kind: input, shape index: {}]
  %s8 = inlined_call_operand.vmem [shape: f32[1,128], index: 8, kind: input, shape index: {}]
  %s9 = inlined_call_operand.hbm [shape: f32[1,4,128], index: 9, kind: output, shape index: {}]
  %s10 = sld [smem:[#allocation0]]
  $region46: #{tpu_custom_call.1} parent=0
    _
  %s12 = ssub.s32 1, %s10
  %s13 = scalar_select 0, %s12, %s10
  $region1: #{tpu_custom_call.1} parent=0
    #allocation2 [shape = 'u8[2048]{0}', space=vmem, size = 0x800, scoped, tag = 'output window, operand 0, single buffered']
    #allocation3 [shape = 's32[1]{0}', space=sflag, size = 0x4, scoped, tag = 'scoped memory for tpu_custom_call.1']
    %14 = vsyncpa [#allocation3], 0
    // Predicated region
    $region2: #{tpu_custom_call.1} parent=1 // pred_check
      _
    $region3: #{tpu_custom_call.1} parent=1 // pred_check_branch
      %16 = sbr.rel (0) target = $region5
    $region4: #{tpu_custom_call.1} parent=1 // pred_region
      _
    $region5: #{tpu_custom_call.1} parent=1 // pred_fallthru
      _
    // Predicated region
    $region6: #{tpu_custom_call.1} parent=1 // pred_check
      _
    $region7: #{tpu_custom_call.1} parent=1 // pred_check_branch
      %18 = sbr.rel (0) target = $region9
    $region8: #{tpu_custom_call.1} parent=1 // pred_region
      _
    $region9: #{tpu_custom_call.1} parent=1 // pred_fallthru
      _
    // Predicated region
    $region10: #{tpu_custom_call.1} parent=1 // pred_check
      _
    $region11: #{tpu_custom_call.1} parent=1 // pred_check_branch
      %20 = sbr.rel (0) target = $region13
    $region12: #{tpu_custom_call.1} parent=1 // pred_region
      _
    $region13: #{tpu_custom_call.1} parent=1 // pred_fallthru
      _
    // Predicated region
    $region14: #{tpu_custom_call.1} parent=1 // pred_check
      _
    $region15: #{tpu_custom_call.1} parent=1 // pred_check_branch
      %22 = sbr.rel (0) target = $region17
    $region16: #{tpu_custom_call.1} parent=1 // pred_region
      _
    $region17: #{tpu_custom_call.1} parent=1 // pred_fallthru
      _
    // Predicated region
    $region18: #{tpu_custom_call.1} parent=1 // pred_check
      _
    $region19: #{tpu_custom_call.1} parent=1 // pred_check_branch
      %24 = sbr.rel (0) target = $region21
    $region20: #{tpu_custom_call.1} parent=1 // pred_region
      _
    $region21: #{tpu_custom_call.1} parent=1 // pred_fallthru
      _
    // Predicated region
    $region22: #{tpu_custom_call.1} parent=1 // pred_check
      _
    $region23: #{tpu_custom_call.1} parent=1 // pred_check_branch
      %26 = sbr.rel (0) target = $region25
    $region24: #{tpu_custom_call.1} parent=1 // pred_region
      _
    $region25: #{tpu_custom_call.1} parent=1 // pred_fallthru
      _
    // Predicated region
    $region26: #{tpu_custom_call.1} parent=1 // pred_check
      _
    $region27: #{tpu_custom_call.1} parent=1 // pred_check_branch
      %28 = sbr.rel (0) target = $region29
    $region28: #{tpu_custom_call.1} parent=1 // pred_region
      _
    $region29: #{tpu_custom_call.1} parent=1 // pred_fallthru
      _
    // Predicated region
    $region30: #{tpu_custom_call.1} parent=1 // pred_check
      _
    $region31: #{tpu_custom_call.1} parent=1 // pred_check_branch
      %30 = sbr.rel (0) target = $region33
    $region32: #{tpu_custom_call.1} parent=1 // pred_region
      _
    $region33: #{tpu_custom_call.1} parent=1 // pred_fallthru
      _
    // Predicated region
    $region34: #{tpu_custom_call.1} parent=1 // pred_check
      _
    $region35: #{tpu_custom_call.1} parent=1 // pred_check_branch
      %32 = sbr.rel (0) target = $region37
    $region36: #{tpu_custom_call.1} parent=1 // pred_region
      _
    $region37: #{tpu_custom_call.1} parent=1 // pred_fallthru
      _
    %v33 = vld [vmem:[%s0] sm:$0xff]
    %v34 = vld [vmem:[%s0 + $0x8] sm:$0xff]
    %v35 = vld [vmem:[%s0 + $0x10] sm:$0xff]
    %v36 = vld [vmem:[%s0 + $0x18] sm:$0xff]
    %v37 = vld [vmem:[%s0 + $0x20] sm:$0xff]
    %v38 = vld [vmem:[%s0 + $0x28] sm:$0xff]
    %v39 = vld [vmem:[%s0 + $0x30] sm:$0xff]
    %v40 = vld [vmem:[%s0 + $0x38] sm:$0xff]
    %v41 = vld [vmem:[%s1] sm:$0xff]
    %v42 = vld [vmem:[%s1 + $0x8] sm:$0xff]
    %v43 = vld [vmem:[%s1 + $0x10] sm:$0xff]
    %v44 = vld [vmem:[%s1 + $0x18] sm:$0xff]
    %v45 = vld [vmem:[%s1 + $0x20] sm:$0xff]
    %v46 = vld [vmem:[%s1 + $0x28] sm:$0xff]
    %v47 = vld [vmem:[%s1 + $0x30] sm:$0xff]
    %v48 = vld [vmem:[%s1 + $0x38] sm:$0xff]
    %v49 = vld [vmem:[%s1 + $0x40] sm:$0xff]
    %v50 = vld [vmem:[%s1 + $0x48] sm:$0xff]
    %v51 = vld [vmem:[%s1 + $0x50] sm:$0xff]
    %v52 = vld [vmem:[%s1 + $0x58] sm:$0xff]
    %v53 = vld [vmem:[%s1 + $0x60] sm:$0xff]
    %v54 = vld [vmem:[%s1 + $0x68] sm:$0xff]
    %v55 = vld [vmem:[%s1 + $0x70] sm:$0xff]
    %v56 = vld [vmem:[%s1 + $0x78] sm:$0xff]
    %v57 = vld [vmem:[%s1 + $0x80] sm:$0xff]
    %v58 = vld [vmem:[%s1 + $0x88] sm:$0xff]
    %v59 = vld [vmem:[%s1 + $0x90] sm:$0xff]
    %v60 = vld [vmem:[%s1 + $0x98] sm:$0xff]
    %v61 = vld [vmem:[%s1 + $0xa0] sm:$0xff]
    %v62 = vld [vmem:[%s1 + $0xa8] sm:$0xff]
    %v63 = vld [vmem:[%s1 + $0xb0] sm:$0xff]
    %v64 = vld [vmem:[%s1 + $0xb8] sm:$0xff]
    %v65 = vld [vmem:[%s1 + $0xc0] sm:$0xff]
    %v66 = vld [vmem:[%s1 + $0xc8] sm:$0xff]
    %v67 = vld [vmem:[%s1 + $0xd0] sm:$0xff]
    %v68 = vld [vmem:[%s1 + $0xd8] sm:$0xff]
    %v69 = vld [vmem:[%s1 + $0xe0] sm:$0xff]
    %v70 = vld [vmem:[%s1 + $0xe8] sm:$0xff]
    %v71 = vld [vmem:[%s1 + $0xf0] sm:$0xff]
    %v72 = vld [vmem:[%s1 + $0xf8] sm:$0xff]
    %v73 = vld [vmem:[%s1 + $0x100] sm:$0xff]
    %v74 = vld [vmem:[%s1 + $0x108] sm:$0xff]
    %v75 = vld [vmem:[%s1 + $0x110] sm:$0xff]
    %v76 = vld [vmem:[%s1 + $0x118] sm:$0xff]
    %v77 = vld [vmem:[%s1 + $0x120] sm:$0xff]
    %v78 = vld [vmem:[%s1 + $0x128] sm:$0xff]
    %v79 = vld [vmem:[%s1 + $0x130] sm:$0xff]
    %v80 = vld [vmem:[%s1 + $0x138] sm:$0xff]
    %v81 = vld [vmem:[%s1 + $0x140] sm:$0xff]
    %v82 = vld [vmem:[%s1 + $0x148] sm:$0xff]
    %v83 = vld [vmem:[%s1 + $0x150] sm:$0xff]
    %v84 = vld [vmem:[%s1 + $0x158] sm:$0xff]
    %v85 = vld [vmem:[%s1 + $0x160] sm:$0xff]
    %v86 = vld [vmem:[%s1 + $0x168] sm:$0xff]
    %v87 = vld [vmem:[%s1 + $0x170] sm:$0xff]
    %v88 = vld [vmem:[%s1 + $0x178] sm:$0xff]
    %v89 = vld [vmem:[%s1 + $0x180] sm:$0xff]
    %v90 = vld [vmem:[%s1 + $0x188] sm:$0xff]
    %v91 = vld [vmem:[%s1 + $0x190] sm:$0xff]
    %v92 = vld [vmem:[%s1 + $0x198] sm:$0xff]
    %v93 = vld [vmem:[%s1 + $0x1a0] sm:$0xff]
    %v94 = vld [vmem:[%s1 + $0x1a8] sm:$0xff]
    %v95 = vld [vmem:[%s1 + $0x1b0] sm:$0xff]
    %v96 = vld [vmem:[%s1 + $0x1b8] sm:$0xff]
    %v97 = vld [vmem:[%s1 + $0x1c0] sm:$0xff]
    %v98 = vld [vmem:[%s1 + $0x1c8] sm:$0xff]
    %v99 = vld [vmem:[%s1 + $0x1d0] sm:$0xff]
    %v100 = vld [vmem:[%s1 + $0x1d8] sm:$0xff]
    %v101 = vld [vmem:[%s1 + $0x1e0] sm:$0xff]
    %v102 = vld [vmem:[%s1 + $0x1e8] sm:$0xff]
    %v103 = vld [vmem:[%s1 + $0x1f0] sm:$0xff]
    %v104 = vld [vmem:[%s1 + $0x1f8] sm:$0xff]
    %v105 = vld [vmem:[%s2] sm:$0xff]
    %v106 = vld [vmem:[%s2 + $0x8] sm:$0xff]
    %v107 = vld [vmem:[%s5] sm:$0xff]
    %v108 = vld [vmem:[%s5 + $0x8] sm:$0xff]
    %v109 = vld [vmem:[%s5 + $0x10] sm:$0xff]
    %v110 = vmul.f32 %v33, %v33
    %v111 = vmul.f32 %v34, %v34
    %v112 = vmul.f32 %v35, %v35
    %v113 = vmul.f32 %v36, %v36
    %v114 = vmul.f32 %v37, %v37
    %v115 = vmul.f32 %v38, %v38
    %v116 = vmul.f32 %v39, %v39
    %v117 = vmul.f32 %v40, %v40
    %118 = vmatprep.subr.mxu0 0.0
    %119 = vmatpush1.msra.mxu0 %v56
    %120 = vmatprep.subr.mxu0 0.0
    %121 = vmatpush1.msra.mxu0 %v55
    %122 = vmatprep.subr.mxu0 0.0
    %123 = vmatpush1.msra.mxu0 %v54
    %124 = vmatprep.subr.mxu0 0.0
    %125 = vmatpush1.msra.mxu0 %v53
    %126 = vmatprep.subr.mxu0 0.0
    %127 = vmatpush1.msra.mxu0 %v52
    %128 = vmatprep.subr.mxu0 0.0
    %129 = vmatpush1.msra.mxu0 %v51
    %130 = vmatprep.subr.mxu0 0.0
    %131 = vmatpush1.msra.mxu0 %v50
    %132 = vmatprep.subr.mxu0 0.0
    %133 = vmatpush1.msra.mxu0 %v49
    %134 = vmatprep.subr.mxu0 0.0
    %135 = vmatpush1.msra.mxu0 %v48
    %136 = vmatprep.subr.mxu0 0.0
    %137 = vmatpush1.msra.mxu0 %v47
    %138 = vmatprep.subr.mxu0 0.0
    %139 = vmatpush1.msra.mxu0 %v46
    %140 = vmatprep.subr.mxu0 0.0
    %141 = vmatpush1.msra.mxu0 %v45
    %142 = vmatprep.subr.mxu0 0.0
    %143 = vmatpush1.msra.mxu0 %v44
    %144 = vmatprep.subr.mxu0 0.0
    %145 = vmatpush1.msra.mxu0 %v43
    %146 = vmatprep.subr.mxu0 0.0
    %147 = vmatpush1.msra.mxu0 %v42
    %148 = vmatprep.subr.mxu0 0.0
    %149 = vmatpush1.msra.mxu0 %v41
    %150 = vmatprep.subr.mxu0 0.0
    %151 = vmatpush2.msra.mxu0 %v72
    %152 = vmatprep.subr.mxu0 0.0
    %153 = vmatpush2.msra.mxu0 %v71
    %154 = vmatprep.subr.mxu0 0.0
    %155 = vmatpush2.msra.mxu0 %v70
    %156 = vmatprep.subr.mxu0 0.0
    %157 = vmatpush2.msra.mxu0 %v69
    %158 = vmatprep.subr.mxu0 0.0
    %159 = vmatpush2.msra.mxu0 %v68
    %160 = vmatprep.subr.mxu0 0.0
    %161 = vmatpush2.msra.mxu0 %v67
    %162 = vmatprep.subr.mxu0 0.0
    %163 = vmatpush2.msra.mxu0 %v66
    %164 = vmatprep.subr.mxu0 0.0
    %165 = vmatpush2.msra.mxu0 %v65
    %166 = vmatprep.subr.mxu0 0.0
    %167 = vmatpush2.msra.mxu0 %v64
    %168 = vmatprep.subr.mxu0 0.0
    %169 = vmatpush2.msra.mxu0 %v63
    %170 = vmatprep.subr.mxu0 0.0
    %171 = vmatpush2.msra.mxu0 %v62
    %172 = vmatprep.subr.mxu0 0.0
    %173 = vmatpush2.msra.mxu0 %v61
    %174 = vmatprep.subr.mxu0 0.0
    %175 = vmatpush2.msra.mxu0 %v60
    %176 = vmatprep.subr.mxu0 0.0
    %177 = vmatpush2.msra.mxu0 %v59
    %178 = vmatprep.subr.mxu0 0.0
    %179 = vmatpush2.msra.mxu0 %v58
    %180 = vmatprep.subr.mxu0 0.0
    %181 = vmatpush2.msra.mxu0 %v57
    %182 = vmatprep.mubr.f32.mxu0 %v34
    %183 = vmatmul.mubr.f32.gmra.mxu0 %v33
    %v184 = vpop.f32.mrf.mxu0
    %v185 = vadd.f32 0.0, %v184
    %v186 = vpop.f32.mrf.mxu0
    %187 = vmatprep.mubr.f32.mxu0 %v38
    %188 = vmatmul.mubr.f32.gmra.mxu0 %v37
    %v189 = vpop.f32.mrf.mxu0
    %v190 = vadd.f32 0.0, %v189
    %v191 = vpop.f32.mrf.mxu0
    %192 = vdwg.mxu0
    %193 = vmatprep.subr.mxu0 0.0
    %194 = vmatpush1.msra.mxu0 %v88
    %195 = vmatprep.subr.mxu0 0.0
    %196 = vmatpush1.msra.mxu0 %v87
    %197 = vmatprep.subr.mxu0 0.0
    %198 = vmatpush1.msra.mxu0 %v86
    %199 = vmatprep.subr.mxu0 0.0
    %200 = vmatpush1.msra.mxu0 %v85
    %201 = vmatprep.subr.mxu0 0.0
    %202 = vmatpush1.msra.mxu0 %v84
    %203 = vmatprep.subr.mxu0 0.0
    %204 = vmatpush1.msra.mxu0 %v83
    %205 = vmatprep.subr.mxu0 0.0
    %206 = vmatpush1.msra.mxu0 %v82
    %207 = vmatprep.subr.mxu0 0.0
    %208 = vmatpush1.msra.mxu0 %v81
    %209 = vmatprep.subr.mxu0 0.0
    %210 = vmatpush1.msra.mxu0 %v80
    %211 = vmatprep.subr.mxu0 0.0
    %212 = vmatpush1.msra.mxu0 %v79
    %213 = vmatprep.subr.mxu0 0.0
    %214 = vmatpush1.msra.mxu0 %v78
    %215 = vmatprep.subr.mxu0 0.0
    %216 = vmatpush1.msra.mxu0 %v77
    %217 = vmatprep.subr.mxu0 0.0
    %218 = vmatpush1.msra.mxu0 %v76
    %219 = vmatprep.subr.mxu0 0.0
    %220 = vmatpush1.msra.mxu0 %v75
    %221 = vmatprep.subr.mxu0 0.0
    %222 = vmatpush1.msra.mxu0 %v74
    %223 = vmatprep.subr.mxu0 0.0
    %224 = vmatpush1.msra.mxu0 %v73
    %225 = vmatprep.subr.mxu0 0.0
    %226 = vmatpush2.msra.mxu0 %v104
    %227 = vmatprep.subr.mxu0 0.0
    %228 = vmatpush2.msra.mxu0 %v103
    %229 = vmatprep.subr.mxu0 0.0
    %230 = vmatpush2.msra.mxu0 %v102
    %231 = vmatprep.subr.mxu0 0.0
    %232 = vmatpush2.msra.mxu0 %v101
    %233 = vmatprep.subr.mxu0 0.0
    %234 = vmatpush2.msra.mxu0 %v100
    %235 = vmatprep.subr.mxu0 0.0
    %236 = vmatpush2.msra.mxu0 %v99
    %237 = vmatprep.subr.mxu0 0.0
    %238 = vmatpush2.msra.mxu0 %v98
    %239 = vmatprep.subr.mxu0 0.0
    %240 = vmatpush2.msra.mxu0 %v97
    %241 = vmatprep.subr.mxu0 0.0
    %242 = vmatpush2.msra.mxu0 %v96
    %243 = vmatprep.subr.mxu0 0.0
    %244 = vmatpush2.msra.mxu0 %v95
    %245 = vmatprep.subr.mxu0 0.0
    %246 = vmatpush2.msra.mxu0 %v94
    %247 = vmatprep.subr.mxu0 0.0
    %248 = vmatpush2.msra.mxu0 %v93
    %249 = vmatprep.subr.mxu0 0.0
    %250 = vmatpush2.msra.mxu0 %v92
    %251 = vmatprep.subr.mxu0 0.0
    %252 = vmatpush2.msra.mxu0 %v91
    %253 = vmatprep.subr.mxu0 0.0
    %254 = vmatpush2.msra.mxu0 %v90
    %255 = vmatprep.subr.mxu0 0.0
    %256 = vmatpush2.msra.mxu0 %v89
    %257 = vmatprep.mubr.f32.mxu0 %v36
    %258 = vmatmul.mubr.f32.gmra.mxu0 %v35
    %v259 = vpop.f32.mrf.mxu0
    %v260 = vadd.f32 %v185, %v259
    %v261 = vpop.f32.mrf.mxu0
    %262 = vmatprep.mubr.f32.mxu0 %v40
    %263 = vmatmul.mubr.f32.gmra.mxu0 %v39
    %v264 = vpop.f32.mrf.mxu0
    %v265 = vadd.f32 %v190, %v264
    %v266 = vpop.f32.mrf.mxu0
    %267 = vdwg.mxu0
    %268 = vmatprep.subr.mxu0 0.0
    %269 = vmatpush1.msra.mxu0 %v56
    %270 = vmatprep.subr.mxu0 0.0
    %271 = vmatpush1.msra.mxu0 %v55
    %272 = vmatprep.subr.mxu0 0.0
    %273 = vmatpush1.msra.mxu0 %v54
    %274 = vmatprep.subr.mxu0 0.0
    %275 = vmatpush1.msra.mxu0 %v53
    %276 = vmatprep.subr.mxu0 0.0
    %277 = vmatpush1.msra.mxu0 %v52
    %278 = vmatprep.subr.mxu0 0.0
    %279 = vmatpush1.msra.mxu0 %v51
    %280 = vmatprep.subr.mxu0 0.0
    %281 = vmatpush1.msra.mxu0 %v50
    %282 = vmatprep.subr.mxu0 0.0
    %283 = vmatpush1.msra.mxu0 %v49
    %284 = vmatprep.subr.mxu0 0.0
    %285 = vmatpush1.msra.mxu0 %v48
    %286 = vmatprep.subr.mxu0 0.0
    %287 = vmatpush1.msra.mxu0 %v47
    %288 = vmatprep.subr.mxu0 0.0
    %289 = vmatpush1.msra.mxu0 %v46
    %290 = vmatprep.subr.mxu0 0.0
    %291 = vmatpush1.msra.mxu0 %v45
    %292 = vmatprep.subr.mxu0 0.0
    %293 = vmatpush1.msra.mxu0 %v44
    %294 = vmatprep.subr.mxu0 0.0
    %295 = vmatpush1.msra.mxu0 %v43
    %296 = vmatprep.subr.mxu0 0.0
    %297 = vmatpush1.msra.mxu0 %v42
    %298 = vmatprep.subr.mxu0 0.0
    %299 = vmatpush1.msra.mxu0 %v41
    %300 = vmatprep.subr.mxu0 0.0
    %301 = vmatpush2.msra.mxu0 %v72
    %302 = vmatprep.subr.mxu0 0.0
    %303 = vmatpush2.msra.mxu0 %v71
    %304 = vmatprep.subr.mxu0 0.0
    %305 = vmatpush2.msra.mxu0 %v70
    %306 = vmatprep.subr.mxu0 0.0
    %307 = vmatpush2.msra.mxu0 %v69
    %308 = vmatprep.subr.mxu0 0.0
    %309 = vmatpush2.msra.mxu0 %v68
    %310 = vmatprep.subr.mxu0 0.0
    %311 = vmatpush2.msra.mxu0 %v67
    %312 = vmatprep.subr.mxu0 0.0
    %313 = vmatpush2.msra.mxu0 %v66
    %314 = vmatprep.subr.mxu0 0.0
    %315 = vmatpush2.msra.mxu0 %v65
    %316 = vmatprep.subr.mxu0 0.0
    %317 = vmatpush2.msra.mxu0 %v64
    %318 = vmatprep.subr.mxu0 0.0
    %319 = vmatpush2.msra.mxu0 %v63
    %320 = vmatprep.subr.mxu0 0.0
    %321 = vmatpush2.msra.mxu0 %v62
    %322 = vmatprep.subr.mxu0 0.0
    %323 = vmatpush2.msra.mxu0 %v61
    %324 = vmatprep.subr.mxu0 0.0
    %325 = vmatpush2.msra.mxu0 %v60
    %326 = vmatprep.subr.mxu0 0.0
    %327 = vmatpush2.msra.mxu0 %v59
    %328 = vmatprep.subr.mxu0 0.0
    %329 = vmatpush2.msra.mxu0 %v58
    %330 = vmatprep.subr.mxu0 0.0
    %331 = vmatpush2.msra.mxu0 %v57
    %332 = vmatprep.mubr.f32.mxu0 %v111
    %333 = vmatmul.mubr.f32.gmra.mxu0 %v110
    %v334 = vpop.f32.mrf.mxu0
    %v335 = vadd.f32 0.0, %v334
    %v336 = vpop.f32.mrf.mxu0
    %337 = vmatprep.mubr.f32.mxu0 %v115
    %338 = vmatmul.mubr.f32.gmra.mxu0 %v114
    %v339 = vpop.f32.mrf.mxu0
    %v340 = vadd.f32 0.0, %v339
    %v341 = vpop.f32.mrf.mxu0
    %342 = vdwg.mxu0
    %343 = vmatprep.subr.mxu0 0.0
    %344 = vmatpush1.msra.mxu0 %v88
    %345 = vmatprep.subr.mxu0 0.0
    %346 = vmatpush1.msra.mxu0 %v87
    %347 = vmatprep.subr.mxu0 0.0
    %348 = vmatpush1.msra.mxu0 %v86
    %349 = vmatprep.subr.mxu0 0.0
    %350 = vmatpush1.msra.mxu0 %v85
    %351 = vmatprep.subr.mxu0 0.0
    %352 = vmatpush1.msra.mxu0 %v84
    %353 = vmatprep.subr.mxu0 0.0
    %354 = vmatpush1.msra.mxu0 %v83
    %355 = vmatprep.subr.mxu0 0.0
    %356 = vmatpush1.msra.mxu0 %v82
    %357 = vmatprep.subr.mxu0 0.0
    %358 = vmatpush1.msra.mxu0 %v81
    %359 = vmatprep.subr.mxu0 0.0
    %360 = vmatpush1.msra.mxu0 %v80
    %361 = vmatprep.subr.mxu0 0.0
    %362 = vmatpush1.msra.mxu0 %v79
    %363 = vmatprep.subr.mxu0 0.0
    %364 = vmatpush1.msra.mxu0 %v78
    %365 = vmatprep.subr.mxu0 0.0
    %366 = vmatpush1.msra.mxu0 %v77
    %367 = vmatprep.subr.mxu0 0.0
    %368 = vmatpush1.msra.mxu0 %v76
    %369 = vmatprep.subr.mxu0 0.0
    %370 = vmatpush1.msra.mxu0 %v75
    %371 = vmatprep.subr.mxu0 0.0
    %372 = vmatpush1.msra.mxu0 %v74
    %373 = vmatprep.subr.mxu0 0.0
    %374 = vmatpush1.msra.mxu0 %v73
    %375 = vmatprep.subr.mxu0 0.0
    %376 = vmatpush2.msra.mxu0 %v104
    %377 = vmatprep.subr.mxu0 0.0
    %378 = vmatpush2.msra.mxu0 %v103
    %379 = vmatprep.subr.mxu0 0.0
    %380 = vmatpush2.msra.mxu0 %v102
    %381 = vmatprep.subr.mxu0 0.0
    %382 = vmatpush2.msra.mxu0 %v101
    %383 = vmatprep.subr.mxu0 0.0
    %384 = vmatpush2.msra.mxu0 %v100
    %385 = vmatprep.subr.mxu0 0.0
    %386 = vmatpush2.msra.mxu0 %v99
    %387 = vmatprep.subr.mxu0 0.0
    %388 = vmatpush2.msra.mxu0 %v98
    %389 = vmatprep.subr.mxu0 0.0
    %390 = vmatpush2.msra.mxu0 %v97
    %391 = vmatprep.subr.mxu0 0.0
    %392 = vmatpush2.msra.mxu0 %v96
    %393 = vmatprep.subr.mxu0 0.0
    %394 = vmatpush2.msra.mxu0 %v95
    %395 = vmatprep.subr.mxu0 0.0
    %396 = vmatpush2.msra.mxu0 %v94
    %397 = vmatprep.subr.mxu0 0.0
    %398 = vmatpush2.msra.mxu0 %v93
    %399 = vmatprep.subr.mxu0 0.0
    %400 = vmatpush2.msra.mxu0 %v92
    %401 = vmatprep.subr.mxu0 0.0
    %402 = vmatpush2.msra.mxu0 %v91
    %403 = vmatprep.subr.mxu0 0.0
    %404 = vmatpush2.msra.mxu0 %v90
    %405 = vmatprep.subr.mxu0 0.0
    %406 = vmatpush2.msra.mxu0 %v89
    %407 = vmatprep.mubr.f32.mxu0 %v113
    %408 = vmatmul.mubr.f32.gmra.mxu0 %v112
    %v409 = vpop.f32.mrf.mxu0
    %v410 = vadd.f32 %v335, %v409
    %v411 = vpop.f32.mrf.mxu0
    %412 = vmatprep.mubr.f32.mxu0 %v117
    %413 = vmatmul.mubr.f32.gmra.mxu0 %v116
    %v414 = vpop.f32.mrf.mxu0
    %v415 = vadd.f32 %v340, %v414
    %v416 = vpop.f32.mrf.mxu0
    %417 = vdwg.mxu0
    %v418 = vmul.f32 %v260, 0.0078125
    %v419 = vmul.f32 %v265, 0.0078125
    %v420 = vmul.f32 %v418, %v260
    %v421 = vmul.f32 %v419, %v265
    %v422 = vsub.f32 %v410, %v420
    %v423 = vsub.f32 %v415, %v421
    %v424 = vmax.f32 %v422, 0.0
    %v425 = vmax.f32 %v423, 0.0
    %v426 = vmul.f32 %v424, 0.007874016
    %v427 = vmul.f32 %v425, 0.007874016
    %v428 = vrsqrt.pop %v426
    %v429 = vmul.f32 %v426, %v428
    %vm430 = vcmp.eq.f32.partialorder %v426, inf
    %v431 = vsel %vm430, %v426, %v429
    %vm432 = vcmp.eq.f32.partialorder %v426, 0.0
    %v433 = vand.u32 %v426, 2147483648
    %v434 = vsel %vm432, %v433, %v431
    %v435 = vrsqrt.pop %v427
    %v436 = vmul.f32 %v427, %v435
    %vm437 = vcmp.eq.f32.partialorder %v427, inf
    %v438 = vsel %vm437, %v427, %v436
    %vm439 = vcmp.eq.f32.partialorder %v427, 0.0
    %v440 = vand.u32 %v427, 2147483648
    %v441 = vsel %vm439, %v440, %v438
    %v442 = vld [vmem:[%s4] sm:$0xff]
    %444 = vset.pattern.permute.xlu0 0
    %445 = vperm.xlu0 %444, %v107
    %v446 = vpop.permute.xlu0 %445
    %vm448 = vcmask 261120
    %v450 = vsel %vm448, %v442, 0
    %452 = vmatprep.subr.mxu0 0.0
    %453 = vmatpush1.msra.mxu0 0.0
    %454 = vmatprep.subr.mxu0 0.0
    %455 = vmatpush1.msra.mxu0 0.0
    %456 = vmatprep.subr.mxu0 0.0
    %457 = vmatpush1.msra.mxu0 0.0
    %458 = vmatprep.subr.mxu0 0.0
    %459 = vmatpush1.msra.mxu0 0.0
    %460 = vmatprep.subr.mxu0 0.0
    %461 = vmatpush1.msra.mxu0 0.0
    %462 = vmatprep.subr.mxu0 0.0
    %463 = vmatpush1.msra.mxu0 0.0
    %464 = vmatprep.subr.mxu0 0.0
    %465 = vmatpush1.msra.mxu0 0.0
    %466 = vmatprep.subr.mxu0 0.0
    %467 = vmatpush1.msra.mxu0 0.0
    %468 = vmatprep.subr.mxu0 0.0
    %469 = vmatpush1.msra.mxu0 0.0
    %470 = vmatprep.subr.mxu0 0.0
    %471 = vmatpush1.msra.mxu0 0.0
    %472 = vmatprep.subr.mxu0 0.0
    %473 = vmatpush1.msra.mxu0 0.0
    %474 = vmatprep.subr.mxu0 0.0
    %475 = vmatpush1.msra.mxu0 0.0
    %476 = vmatprep.subr.mxu0 0.0
    %477 = vmatpush1.msra.mxu0 %v441
    %478 = vmatprep.subr.mxu0 0.0
    %479 = vmatpush1.msra.mxu0 %v434
    %480 = vmatprep.subr.mxu0 0.0
    %481 = vmatpush1.msra.mxu0 %v419
    %482 = vmatprep.subr.mxu0 0.0
    %483 = vmatpush1.msra.mxu0 %v418
    %484 = vmatprep.subr.mxu0 0.0
    %485 = vmatpush2.msra.mxu0 0.0
    %486 = vmatprep.subr.mxu0 0.0
    %487 = vmatpush2.msra.mxu0 0.0
    %488 = vmatprep.subr.mxu0 0.0
    %489 = vmatpush2.msra.mxu0 0.0
    %490 = vmatprep.subr.mxu0 0.0
    %491 = vmatpush2.msra.mxu0 0.0
    %492 = vmatprep.subr.mxu0 0.0
    %493 = vmatpush2.msra.mxu0 0.0
    %494 = vmatprep.subr.mxu0 0.0
    %495 = vmatpush2.msra.mxu0 0.0
    %496 = vmatprep.subr.mxu0 0.0
    %497 = vmatpush2.msra.mxu0 0.0
    %498 = vmatprep.subr.mxu0 0.0
    %499 = vmatpush2.msra.mxu0 0.0
    %500 = vmatprep.subr.mxu0 0.0
    %501 = vmatpush2.msra.mxu0 0.0
    %502 = vmatprep.subr.mxu0 0.0
    %503 = vmatpush2.msra.mxu0 0.0
    %504 = vmatprep.subr.mxu0 0.0
    %505 = vmatpush2.msra.mxu0 0.0
    %506 = vmatprep.subr.mxu0 0.0
    %507 = vmatpush2.msra.mxu0 0.0
    %508 = vmatprep.subr.mxu0 0.0
    %509 = vmatpush2.msra.mxu0 0.0
    %510 = vmatprep.subr.mxu0 0.0
    %511 = vmatpush2.msra.mxu0 0.0
    %512 = vmatprep.subr.mxu0 0.0
    %513 = vmatpush2.msra.mxu0 0.0
    %514 = vmatprep.subr.mxu0 0.0
    %515 = vmatpush2.msra.mxu0 0.0
    %516 = vmatprep.mubr.f32.mxu0 0.0
    %517 = vmatmul.mubr.f32.gmra.mxu0 %v450
    %v518 = vpop.f32.mrf.mxu0
    %v519 = vadd.f32 %v446, %v518
    %v520 = vpop.f32.mrf.mxu0
    %521 = vdwg.mxu0
    %v522 = vld [vmem:[%s3] sm:$0xff]
    %v525 = vcombine.high %v105, %v105
    %v526 = vcombine.high %v106, %v106
    %vm527 = vcmask 31744
    %v529 = vsel %vm527, %v519, 0
    %vm531 = vcmask 1043456
    %v532 = vsel %vm531, %v105, 0
    %v534 = vsel %vm531, %v525, 0
    %v536 = vsel %vm531, %v106, 0
    %v538 = vsel %vm531, %v526, 0
    %540 = vmatprep.subr.mxu0 0.0
    %541 = vmatpush1.msra.mxu0 0.0
    %542 = vmatprep.subr.mxu0 0.0
    %543 = vmatpush1.msra.mxu0 0.0
    %544 = vmatprep.subr.mxu0 0.0
    %545 = vmatpush1.msra.mxu0 0.0
    %546 = vmatprep.subr.mxu0 0.0
    %547 = vmatpush1.msra.mxu0 0.0
    %548 = vmatprep.subr.mxu0 0.0
    %549 = vmatpush1.msra.mxu0 0.0
    %550 = vmatprep.subr.mxu0 0.0
    %551 = vmatpush1.msra.mxu0 0.0
    %552 = vmatprep.subr.mxu0 0.0
    %553 = vmatpush1.msra.mxu0 0.0
    %554 = vmatprep.subr.mxu0 0.0
    %555 = vmatpush1.msra.mxu0 0.0
    %556 = vmatprep.subr.mxu0 0.0
    %557 = vmatpush1.msra.mxu0 0.0
    %558 = vmatprep.subr.mxu0 0.0
    %559 = vmatpush1.msra.mxu0 0.0
    %560 = vmatprep.subr.mxu0 0.0
    %561 = vmatpush1.msra.mxu0 0.0
    %562 = vmatprep.subr.mxu0 0.0
    %563 = vmatpush1.msra.mxu0 0.0
    %564 = vmatprep.subr.mxu0 0.0
    %565 = vmatpush1.msra.mxu0 0.0
    %566 = vmatprep.subr.mxu0 0.0
    %567 = vmatpush1.msra.mxu0 0.0
    %568 = vmatprep.subr.mxu0 0.0
    %569 = vmatpush1.msra.mxu0 0.0
    %570 = vmatprep.subr.mxu0 %v534
    %571 = vmatpush1.msra.mxu0 %v532
    %572 = vmatprep.subr.mxu0 0.0
    %573 = vmatpush2.msra.mxu0 0.0
    %574 = vmatprep.subr.mxu0 0.0
    %575 = vmatpush2.msra.mxu0 0.0
    %576 = vmatprep.subr.mxu0 0.0
    %577 = vmatpush2.msra.mxu0 0.0
    %578 = vmatprep.subr.mxu0 0.0
    %579 = vmatpush2.msra.mxu0 0.0
    %580 = vmatprep.subr.mxu0 0.0
    %581 = vmatpush2.msra.mxu0 0.0
    %582 = vmatprep.subr.mxu0 0.0
    %583 = vmatpush2.msra.mxu0 0.0
    %584 = vmatprep.subr.mxu0 0.0
    %585 = vmatpush2.msra.mxu0 0.0
    %586 = vmatprep.subr.mxu0 0.0
    %587 = vmatpush2.msra.mxu0 0.0
    %588 = vmatprep.subr.mxu0 0.0
    %589 = vmatpush2.msra.mxu0 0.0
    %590 = vmatprep.subr.mxu0 0.0
    %591 = vmatpush2.msra.mxu0 0.0
    %592 = vmatprep.subr.mxu0 0.0
    %593 = vmatpush2.msra.mxu0 0.0
    %594 = vmatprep.subr.mxu0 0.0
    %595 = vmatpush2.msra.mxu0 0.0
    %596 = vmatprep.subr.mxu0 0.0
    %597 = vmatpush2.msra.mxu0 0.0
    %598 = vmatprep.subr.mxu0 0.0
    %599 = vmatpush2.msra.mxu0 0.0
    %600 = vmatprep.subr.mxu0 0.0
    %601 = vmatpush2.msra.mxu0 0.0
    %602 = vmatprep.subr.mxu0 0.0
    %603 = vmatpush2.msra.mxu0 0.0
    %604 = vmatprep.mubr.f32.mxu0 0.0
    %605 = vmatmul.mubr.f32.gmra.mxu0 %v529
    %v606 = vpop.f32.mrf.mxu0
    %v607 = vadd.f32 0.0, %v606
    %v608 = vpop.f32.mrf.mxu0
    %v609 = vadd.f32 0.0, %v608
    %610 = vdwg.mxu0
    %611 = vmatprep.subr.mxu0 0.0
    %612 = vmatpush1.msra.mxu0 0.0
    %613 = vmatprep.subr.mxu0 0.0
    %614 = vmatpush1.msra.mxu0 0.0
    %615 = vmatprep.subr.mxu0 0.0
    %616 = vmatpush1.msra.mxu0 0.0
    %617 = vmatprep.subr.mxu0 0.0
    %618 = vmatpush1.msra.mxu0 0.0
    %619 = vmatprep.subr.mxu0 0.0
    %620 = vmatpush1.msra.mxu0 0.0
    %621 = vmatprep.subr.mxu0 0.0
    %622 = vmatpush1.msra.mxu0 0.0
    %623 = vmatprep.subr.mxu0 0.0
    %624 = vmatpush1.msra.mxu0 0.0
    %625 = vmatprep.subr.mxu0 0.0
    %626 = vmatpush1.msra.mxu0 0.0
    %627 = vmatprep.subr.mxu0 0.0
    %628 = vmatpush1.msra.mxu0 0.0
    %629 = vmatprep.subr.mxu0 0.0
    %630 = vmatpush1.msra.mxu0 0.0
    %631 = vmatprep.subr.mxu0 0.0
    %632 = vmatpush1.msra.mxu0 0.0
    %633 = vmatprep.subr.mxu0 0.0
    %634 = vmatpush1.msra.mxu0 0.0
    %635 = vmatprep.subr.mxu0 0.0
    %636 = vmatpush1.msra.mxu0 0.0
    %637 = vmatprep.subr.mxu0 0.0
    %638 = vmatpush1.msra.mxu0 0.0
    %639 = vmatprep.subr.mxu0 0.0
    %640 = vmatpush1.msra.mxu0 0.0
    %641 = vmatprep.subr.mxu0 %v538
    %642 = vmatpush1.msra.mxu0 %v536
    %643 = vmatprep.subr.mxu0 0.0
    %644 = vmatpush2.msra.mxu0 0.0
    %645 = vmatprep.subr.mxu0 0.0
    %646 = vmatpush2.msra.mxu0 0.0
    %647 = vmatprep.subr.mxu0 0.0
    %648 = vmatpush2.msra.mxu0 0.0
    %649 = vmatprep.subr.mxu0 0.0
    %650 = vmatpush2.msra.mxu0 0.0
    %651 = vmatprep.subr.mxu0 0.0
    %652 = vmatpush2.msra.mxu0 0.0
    %653 = vmatprep.subr.mxu0 0.0
    %654 = vmatpush2.msra.mxu0 0.0
    %655 = vmatprep.subr.mxu0 0.0
    %656 = vmatpush2.msra.mxu0 0.0
    %657 = vmatprep.subr.mxu0 0.0
    %658 = vmatpush2.msra.mxu0 0.0
    %659 = vmatprep.subr.mxu0 0.0
    %660 = vmatpush2.msra.mxu0 0.0
    %661 = vmatprep.subr.mxu0 0.0
    %662 = vmatpush2.msra.mxu0 0.0
    %663 = vmatprep.subr.mxu0 0.0
    %664 = vmatpush2.msra.mxu0 0.0
    %665 = vmatprep.subr.mxu0 0.0
    %666 = vmatpush2.msra.mxu0 0.0
    %667 = vmatprep.subr.mxu0 0.0
    %668 = vmatpush2.msra.mxu0 0.0
    %669 = vmatprep.subr.mxu0 0.0
    %670 = vmatpush2.msra.mxu0 0.0
    %671 = vmatprep.subr.mxu0 0.0
    %672 = vmatpush2.msra.mxu0 0.0
    %673 = vmatprep.subr.mxu0 0.0
    %674 = vmatpush2.msra.mxu0 0.0
    %675 = vmatprep.mubr.f32.mxu0 0.0
    %676 = vmatmul.mubr.f32.gmra.mxu0 %v529
    %v677 = vpop.f32.mrf.mxu0
    %v678 = vadd.f32 0.0, %v677
    %v679 = vpop.f32.mrf.mxu0
    %v680 = vadd.f32 0.0, %v679
    %681 = vdwg.mxu0
    %vm682 = vcmask 130048
    %v684 = vsel %vm682, %v522, 0
    %686 = vmatprep.subr.mxu0 0.0
    %687 = vmatpush1.msra.mxu0 0.0
    %688 = vmatprep.subr.mxu0 0.0
    %689 = vmatpush1.msra.mxu0 0.0
    %690 = vmatprep.subr.mxu0 0.0
    %691 = vmatpush1.msra.mxu0 0.0
    %692 = vmatprep.subr.mxu0 0.0
    %693 = vmatpush1.msra.mxu0 0.0
    %694 = vmatprep.subr.mxu0 0.0
    %695 = vmatpush1.msra.mxu0 0.0
    %696 = vmatprep.subr.mxu0 0.0
    %697 = vmatpush1.msra.mxu0 0.0
    %698 = vmatprep.subr.mxu0 0.0
    %699 = vmatpush1.msra.mxu0 0.0
    %700 = vmatprep.subr.mxu0 0.0
    %701 = vmatpush1.msra.mxu0 0.0
    %702 = vmatprep.subr.mxu0 0.0
    %703 = vmatpush1.msra.mxu0 0.0
    %704 = vmatprep.subr.mxu0 0.0
    %705 = vmatpush1.msra.mxu0 0.0
    %706 = vmatprep.subr.mxu0 0.0
    %707 = vmatpush1.msra.mxu0 0.0
    %708 = vmatprep.subr.mxu0 0.0
    %709 = vmatpush1.msra.mxu0 0.0
    %710 = vmatprep.subr.mxu0 0.0
    %711 = vmatpush1.msra.mxu0 0.0
    %712 = vmatprep.subr.mxu0 0.0
    %713 = vmatpush1.msra.mxu0 0.0
    %714 = vmatprep.subr.mxu0 %v38
    %715 = vmatpush1.msra.mxu0 %v37
    %716 = vmatprep.subr.mxu0 %v34
    %717 = vmatpush1.msra.mxu0 %v33
    %718 = vmatprep.subr.mxu0 0.0
    %719 = vmatpush2.msra.mxu0 0.0
    %720 = vmatprep.subr.mxu0 0.0
    %721 = vmatpush2.msra.mxu0 0.0
    %722 = vmatprep.subr.mxu0 0.0
    %723 = vmatpush2.msra.mxu0 0.0
    %724 = vmatprep.subr.mxu0 0.0
    %725 = vmatpush2.msra.mxu0 0.0
    %726 = vmatprep.subr.mxu0 0.0
    %727 = vmatpush2.msra.mxu0 0.0
    %728 = vmatprep.subr.mxu0 0.0
    %729 = vmatpush2.msra.mxu0 0.0
    %730 = vmatprep.subr.mxu0 0.0
    %731 = vmatpush2.msra.mxu0 0.0
    %732 = vmatprep.subr.mxu0 0.0
    %733 = vmatpush2.msra.mxu0 0.0
    %734 = vmatprep.subr.mxu0 0.0
    %735 = vmatpush2.msra.mxu0 0.0
    %736 = vmatprep.subr.mxu0 0.0
    %737 = vmatpush2.msra.mxu0 0.0
    %738 = vmatprep.subr.mxu0 0.0
    %739 = vmatpush2.msra.mxu0 0.0
    %740 = vmatprep.subr.mxu0 0.0
    %741 = vmatpush2.msra.mxu0 0.0
    %742 = vmatprep.subr.mxu0 0.0
    %743 = vmatpush2.msra.mxu0 0.0
    %744 = vmatprep.subr.mxu0 0.0
    %745 = vmatpush2.msra.mxu0 0.0
    %746 = vmatprep.subr.mxu0 0.0
    %747 = vmatpush2.msra.mxu0 0.0
    %748 = vmatprep.subr.mxu0 0.0
    %749 = vmatpush2.msra.mxu0 0.0
    %750 = vmatprep.mubr.f32.mxu0 0.0
    %751 = vmatmul.mubr.f32.gmra.mxu0 %v684
    %v752 = vpop.f32.mrf.mxu0
    %v753 = vadd.f32 %v607, %v752
    %v754 = vpop.f32.mrf.mxu0
    %v755 = vadd.f32 %v609, %v754
    %756 = vdwg.mxu0
    %757 = vmatprep.subr.mxu0 0.0
    %758 = vmatpush1.msra.mxu0 0.0
    %759 = vmatprep.subr.mxu0 0.0
    %760 = vmatpush1.msra.mxu0 0.0
    %761 = vmatprep.subr.mxu0 0.0
    %762 = vmatpush1.msra.mxu0 0.0
    %763 = vmatprep.subr.mxu0 0.0
    %764 = vmatpush1.msra.mxu0 0.0
    %765 = vmatprep.subr.mxu0 0.0
    %766 = vmatpush1.msra.mxu0 0.0
    %767 = vmatprep.subr.mxu0 0.0
    %768 = vmatpush1.msra.mxu0 0.0
    %769 = vmatprep.subr.mxu0 0.0
    %770 = vmatpush1.msra.mxu0 0.0
    %771 = vmatprep.subr.mxu0 0.0
    %772 = vmatpush1.msra.mxu0 0.0
    %773 = vmatprep.subr.mxu0 0.0
    %774 = vmatpush1.msra.mxu0 0.0
    %775 = vmatprep.subr.mxu0 0.0
    %776 = vmatpush1.msra.mxu0 0.0
    %777 = vmatprep.subr.mxu0 0.0
    %778 = vmatpush1.msra.mxu0 0.0
    %779 = vmatprep.subr.mxu0 0.0
    %780 = vmatpush1.msra.mxu0 0.0
    %781 = vmatprep.subr.mxu0 0.0
    %782 = vmatpush1.msra.mxu0 0.0
    %783 = vmatprep.subr.mxu0 0.0
    %784 = vmatpush1.msra.mxu0 0.0
    %785 = vmatprep.subr.mxu0 %v40
    %786 = vmatpush1.msra.mxu0 %v39
    %787 = vmatprep.subr.mxu0 %v36
    %788 = vmatpush1.msra.mxu0 %v35
    %789 = vmatprep.subr.mxu0 0.0
    %790 = vmatpush2.msra.mxu0 0.0
    %791 = vmatprep.subr.mxu0 0.0
    %792 = vmatpush2.msra.mxu0 0.0
    %793 = vmatprep.subr.mxu0 0.0
    %794 = vmatpush2.msra.mxu0 0.0
    %795 = vmatprep.subr.mxu0 0.0
    %796 = vmatpush2.msra.mxu0 0.0
    %797 = vmatprep.subr.mxu0 0.0
    %798 = vmatpush2.msra.mxu0 0.0
    %799 = vmatprep.subr.mxu0 0.0
    %800 = vmatpush2.msra.mxu0 0.0
    %801 = vmatprep.subr.mxu0 0.0
    %802 = vmatpush2.msra.mxu0 0.0
    %803 = vmatprep.subr.mxu0 0.0
    %804 = vmatpush2.msra.mxu0 0.0
    %805 = vmatprep.subr.mxu0 0.0
    %806 = vmatpush2.msra.mxu0 0.0
    %807 = vmatprep.subr.mxu0 0.0
    %808 = vmatpush2.msra.mxu0 0.0
    %809 = vmatprep.subr.mxu0 0.0
    %810 = vmatpush2.msra.mxu0 0.0
    %811 = vmatprep.subr.mxu0 0.0
    %812 = vmatpush2.msra.mxu0 0.0
    %813 = vmatprep.subr.mxu0 0.0
    %814 = vmatpush2.msra.mxu0 0.0
    %815 = vmatprep.subr.mxu0 0.0
    %816 = vmatpush2.msra.mxu0 0.0
    %817 = vmatprep.subr.mxu0 0.0
    %818 = vmatpush2.msra.mxu0 0.0
    %819 = vmatprep.subr.mxu0 0.0
    %820 = vmatpush2.msra.mxu0 0.0
    %821 = vmatprep.mubr.f32.mxu0 0.0
    %822 = vmatmul.mubr.f32.gmra.mxu0 %v684
    %v823 = vpop.f32.mrf.mxu0
    %v824 = vadd.f32 %v678, %v823
    %v825 = vpop.f32.mrf.mxu0
    %v826 = vadd.f32 %v680, %v825
    %827 = vdwg.mxu0
    %v828 = vmax.f32 %v753, 0.0
    %v829 = vmax.f32 %v755, 0.0
    %v830 = vmax.f32 %v824, 0.0
    %v831 = vmax.f32 %v826, 0.0
    %v832 = vld [vmem:[%s6] sm:$0xff]
    %v833 = vld [vmem:[%s6 + $0x8] sm:$0xff]
    %835 = vset.pattern.permute.xlu0 0
    %836 = vperm.xlu0 %835, %v108
    %v837 = vpop.permute.xlu0 %836
    %840 = vset.pattern.permute.xlu0 0
    %841 = vperm.xlu0 %840, %v109
    %v842 = vpop.permute.xlu0 %841
    %vm844 = vcmask 64512
    %v846 = vsel %vm844, %v832, 0
    %v849 = vsel %vm844, %v833, 0
    %851 = vmatprep.subr.mxu0 0.0
    %852 = vmatpush1.msra.mxu0 0.0
    %853 = vmatprep.subr.mxu0 0.0
    %854 = vmatpush1.msra.mxu0 0.0
    %855 = vmatprep.subr.mxu0 0.0
    %856 = vmatpush1.msra.mxu0 0.0
    %857 = vmatprep.subr.mxu0 0.0
    %858 = vmatpush1.msra.mxu0 0.0
    %859 = vmatprep.subr.mxu0 0.0
    %860 = vmatpush1.msra.mxu0 0.0
    %861 = vmatprep.subr.mxu0 0.0
    %862 = vmatpush1.msra.mxu0 0.0
    %863 = vmatprep.subr.mxu0 0.0
    %864 = vmatpush1.msra.mxu0 0.0
    %865 = vmatprep.subr.mxu0 0.0
    %866 = vmatpush1.msra.mxu0 0.0
    %867 = vmatprep.subr.mxu0 0.0
    %868 = vmatpush1.msra.mxu0 0.0
    %869 = vmatprep.subr.mxu0 0.0
    %870 = vmatpush1.msra.mxu0 0.0
    %871 = vmatprep.subr.mxu0 0.0
    %872 = vmatpush1.msra.mxu0 0.0
    %873 = vmatprep.subr.mxu0 0.0
    %874 = vmatpush1.msra.mxu0 0.0
    %875 = vmatprep.subr.mxu0 0.0
    %876 = vmatpush1.msra.mxu0 0.0
    %877 = vmatprep.subr.mxu0 0.0
    %878 = vmatpush1.msra.mxu0 0.0
    %879 = vmatprep.subr.mxu0 0.0
    %880 = vmatpush1.msra.mxu0 0.0
    %881 = vmatprep.subr.mxu0 %v829
    %882 = vmatpush1.msra.mxu0 %v828
    %883 = vmatprep.subr.mxu0 0.0
    %884 = vmatpush2.msra.mxu0 0.0
    %885 = vmatprep.subr.mxu0 0.0
    %886 = vmatpush2.msra.mxu0 0.0
    %887 = vmatprep.subr.mxu0 0.0
    %888 = vmatpush2.msra.mxu0 0.0
    %889 = vmatprep.subr.mxu0 0.0
    %890 = vmatpush2.msra.mxu0 0.0
    %891 = vmatprep.subr.mxu0 0.0
    %892 = vmatpush2.msra.mxu0 0.0
    %893 = vmatprep.subr.mxu0 0.0
    %894 = vmatpush2.msra.mxu0 0.0
    %895 = vmatprep.subr.mxu0 0.0
    %896 = vmatpush2.msra.mxu0 0.0
    %897 = vmatprep.subr.mxu0 0.0
    %898 = vmatpush2.msra.mxu0 0.0
    %899 = vmatprep.subr.mxu0 0.0
    %900 = vmatpush2.msra.mxu0 0.0
    %901 = vmatprep.subr.mxu0 0.0
    %902 = vmatpush2.msra.mxu0 0.0
    %903 = vmatprep.subr.mxu0 0.0
    %904 = vmatpush2.msra.mxu0 0.0
    %905 = vmatprep.subr.mxu0 0.0
    %906 = vmatpush2.msra.mxu0 0.0
    %907 = vmatprep.subr.mxu0 0.0
    %908 = vmatpush2.msra.mxu0 0.0
    %909 = vmatprep.subr.mxu0 0.0
    %910 = vmatpush2.msra.mxu0 0.0
    %911 = vmatprep.subr.mxu0 0.0
    %912 = vmatpush2.msra.mxu0 0.0
    %913 = vmatprep.subr.mxu0 0.0
    %914 = vmatpush2.msra.mxu0 0.0
    %915 = vmatprep.mubr.f32.mxu0 0.0
    %916 = vmatmul.mubr.f32.gmra.mxu0 %v846
    %v917 = vpop.f32.mrf.mxu0
    %v918 = vadd.f32 %v837, %v917
    %v919 = vpop.f32.mrf.mxu0
    %v920 = vadd.f32 %v837, %v919
    %921 = vmatprep.mubr.f32.mxu0 0.0
    %922 = vmatmul.mubr.f32.gmra.mxu0 %v849
    %v923 = vpop.f32.mrf.mxu0
    %v924 = vadd.f32 %v842, %v923
    %v925 = vpop.f32.mrf.mxu0
    %v926 = vadd.f32 %v842, %v925
    %927 = vdwg.mxu0
    %928 = vmatprep.subr.mxu0 0.0
    %929 = vmatpush1.msra.mxu0 0.0
    %930 = vmatprep.subr.mxu0 0.0
    %931 = vmatpush1.msra.mxu0 0.0
    %932 = vmatprep.subr.mxu0 0.0
    %933 = vmatpush1.msra.mxu0 0.0
    %934 = vmatprep.subr.mxu0 0.0
    %935 = vmatpush1.msra.mxu0 0.0
    %936 = vmatprep.subr.mxu0 0.0
    %937 = vmatpush1.msra.mxu0 0.0
    %938 = vmatprep.subr.mxu0 0.0
    %939 = vmatpush1.msra.mxu0 0.0
    %940 = vmatprep.subr.mxu0 0.0
    %941 = vmatpush1.msra.mxu0 0.0
    %942 = vmatprep.subr.mxu0 0.0
    %943 = vmatpush1.msra.mxu0 0.0
    %944 = vmatprep.subr.mxu0 0.0
    %945 = vmatpush1.msra.mxu0 0.0
    %946 = vmatprep.subr.mxu0 0.0
    %947 = vmatpush1.msra.mxu0 0.0
    %948 = vmatprep.subr.mxu0 0.0
    %949 = vmatpush1.msra.mxu0 0.0
    %950 = vmatprep.subr.mxu0 0.0
    %951 = vmatpush1.msra.mxu0 0.0
    %952 = vmatprep.subr.mxu0 0.0
    %953 = vmatpush1.msra.mxu0 0.0
    %954 = vmatprep.subr.mxu0 0.0
    %955 = vmatpush1.msra.mxu0 0.0
    %956 = vmatprep.subr.mxu0 0.0
    %957 = vmatpush1.msra.mxu0 0.0
    %958 = vmatprep.subr.mxu0 %v831
    %959 = vmatpush1.msra.mxu0 %v830
    %960 = vmatprep.subr.mxu0 0.0
    %961 = vmatpush2.msra.mxu0 0.0
    %962 = vmatprep.subr.mxu0 0.0
    %963 = vmatpush2.msra.mxu0 0.0
    %964 = vmatprep.subr.mxu0 0.0
    %965 = vmatpush2.msra.mxu0 0.0
    %966 = vmatprep.subr.mxu0 0.0
    %967 = vmatpush2.msra.mxu0 0.0
    %968 = vmatprep.subr.mxu0 0.0
    %969 = vmatpush2.msra.mxu0 0.0
    %970 = vmatprep.subr.mxu0 0.0
    %971 = vmatpush2.msra.mxu0 0.0
    %972 = vmatprep.subr.mxu0 0.0
    %973 = vmatpush2.msra.mxu0 0.0
    %974 = vmatprep.subr.mxu0 0.0
    %975 = vmatpush2.msra.mxu0 0.0
    %976 = vmatprep.subr.mxu0 0.0
    %977 = vmatpush2.msra.mxu0 0.0
    %978 = vmatprep.subr.mxu0 0.0
    %979 = vmatpush2.msra.mxu0 0.0
    %980 = vmatprep.subr.mxu0 0.0
    %981 = vmatpush2.msra.mxu0 0.0
    %982 = vmatprep.subr.mxu0 0.0
    %983 = vmatpush2.msra.mxu0 0.0
    %984 = vmatprep.subr.mxu0 0.0
    %985 = vmatpush2.msra.mxu0 0.0
    %986 = vmatprep.subr.mxu0 0.0
    %987 = vmatpush2.msra.mxu0 0.0
    %988 = vmatprep.subr.mxu0 0.0
    %989 = vmatpush2.msra.mxu0 0.0
    %990 = vmatprep.subr.mxu0 0.0
    %991 = vmatpush2.msra.mxu0 0.0
    %992 = vmatprep.mubr.f32.mxu0 0.0
    %993 = vmatmul.mubr.f32.gmra.mxu0 %v846
    %v994 = vpop.f32.mrf.mxu0
    %v995 = vadd.f32 %v837, %v994
    %v996 = vpop.f32.mrf.mxu0
    %v997 = vadd.f32 %v837, %v996
    %998 = vmatprep.mubr.f32.mxu0 0.0
    %999 = vmatmul.mubr.f32.gmra.mxu0 %v849
    %v1000 = vpop.f32.mrf.mxu0
    %v1001 = vadd.f32 %v842, %v1000
    %v1002 = vpop.f32.mrf.mxu0
    %v1003 = vadd.f32 %v842, %v1002
    %1004 = vdwg.mxu0
    %v1005 = vmax.f32 %v918, %v995
    %v1006 = vmax.f32 %v920, %v997
    %v1007 = vmax.f32 %v1005, %v1006
    %1008 = vmax.xlane.f32.xlu0 %v1007
    %v1009 = vpop.xlane.xlu0 %1008
    %v1010 = vmax.f32 %v924, %v1001
    %v1011 = vmax.f32 %v926, %v1003
    %v1012 = vmax.f32 %v1010, %v1011
    %1013 = vmax.xlane.f32.xlu0 %v1012
    %v1014 = vpop.xlane.xlu0 %1013
    %v1015 = vsub.f32 %v918, %v1009
    %v1016 = vsub.f32 %v920, %v1009
    %v1017 = vsub.f32 %v995, %v1009
    %v1018 = vsub.f32 %v997, %v1009
    %v1019 = vsub.f32 %v924, %v1014
    %v1020 = vsub.f32 %v926, %v1014
    %v1021 = vsub.f32 %v1001, %v1014
    %v1022 = vsub.f32 %v1003, %v1014
    %v1023 = vmul.f32 %v1015, 1.442695
    %v1024 = vpow.pop %v1023
    %v1025 = vmul.f32 %v1016, 1.442695
    %v1026 = vpow.pop %v1025
    %v1027 = vmul.f32 %v1017, 1.442695
    %v1028 = vpow.pop %v1027
    %v1029 = vmul.f32 %v1018, 1.442695
    %v1030 = vpow.pop %v1029
    %v1031 = vmul.f32 %v1019, 1.442695
    %v1032 = vpow.pop %v1031
    %v1033 = vmul.f32 %v1020, 1.442695
    %v1034 = vpow.pop %v1033
    %v1035 = vmul.f32 %v1021, 1.442695
    %v1036 = vpow.pop %v1035
    %v1037 = vmul.f32 %v1022, 1.442695
    %v1038 = vpow.pop %v1037
    %1039 = vmatprep.subr.mxu0 0.0
    %1040 = vmatpush1.msra.mxu0 %v56
    %1041 = vmatprep.subr.mxu0 0.0
    %1042 = vmatpush1.msra.mxu0 %v55
    %1043 = vmatprep.subr.mxu0 0.0
    %1044 = vmatpush1.msra.mxu0 %v54
    %1045 = vmatprep.subr.mxu0 0.0
    %1046 = vmatpush1.msra.mxu0 %v53
    %1047 = vmatprep.subr.mxu0 0.0
    %1048 = vmatpush1.msra.mxu0 %v52
    %1049 = vmatprep.subr.mxu0 0.0
    %1050 = vmatpush1.msra.mxu0 %v51
    %1051 = vmatprep.subr.mxu0 0.0
    %1052 = vmatpush1.msra.mxu0 %v50
    %1053 = vmatprep.subr.mxu0 0.0
    %1054 = vmatpush1.msra.mxu0 %v49
    %1055 = vmatprep.subr.mxu0 0.0
    %1056 = vmatpush1.msra.mxu0 %v48
    %1057 = vmatprep.subr.mxu0 0.0
    %1058 = vmatpush1.msra.mxu0 %v47
    %1059 = vmatprep.subr.mxu0 0.0
    %1060 = vmatpush1.msra.mxu0 %v46
    %1061 = vmatprep.subr.mxu0 0.0
    %1062 = vmatpush1.msra.mxu0 %v45
    %1063 = vmatprep.subr.mxu0 0.0
    %1064 = vmatpush1.msra.mxu0 %v44
    %1065 = vmatprep.subr.mxu0 0.0
    %1066 = vmatpush1.msra.mxu0 %v43
    %1067 = vmatprep.subr.mxu0 0.0
    %1068 = vmatpush1.msra.mxu0 %v42
    %1069 = vmatprep.subr.mxu0 0.0
    %1070 = vmatpush1.msra.mxu0 %v41
    %1071 = vmatprep.subr.mxu0 0.0
    %1072 = vmatpush2.msra.mxu0 %v72
    %1073 = vmatprep.subr.mxu0 0.0
    %1074 = vmatpush2.msra.mxu0 %v71
    %1075 = vmatprep.subr.mxu0 0.0
    %1076 = vmatpush2.msra.mxu0 %v70
    %1077 = vmatprep.subr.mxu0 0.0
    %1078 = vmatpush2.msra.mxu0 %v69
    %1079 = vmatprep.subr.mxu0 0.0
    %1080 = vmatpush2.msra.mxu0 %v68
    %1081 = vmatprep.subr.mxu0 0.0
    %1082 = vmatpush2.msra.mxu0 %v67
    %1083 = vmatprep.subr.mxu0 0.0
    %1084 = vmatpush2.msra.mxu0 %v66
    %1085 = vmatprep.subr.mxu0 0.0
    %1086 = vmatpush2.msra.mxu0 %v65
    %1087 = vmatprep.subr.mxu0 0.0
    %1088 = vmatpush2.msra.mxu0 %v64
    %1089 = vmatprep.subr.mxu0 0.0
    %1090 = vmatpush2.msra.mxu0 %v63
    %1091 = vmatprep.subr.mxu0 0.0
    %1092 = vmatpush2.msra.mxu0 %v62
    %1093 = vmatprep.subr.mxu0 0.0
    %1094 = vmatpush2.msra.mxu0 %v61
    %1095 = vmatprep.subr.mxu0 0.0
    %1096 = vmatpush2.msra.mxu0 %v60
    %1097 = vmatprep.subr.mxu0 0.0
    %1098 = vmatpush2.msra.mxu0 %v59
    %1099 = vmatprep.subr.mxu0 0.0
    %1100 = vmatpush2.msra.mxu0 %v58
    %1101 = vmatprep.subr.mxu0 0.0
    %1102 = vmatpush2.msra.mxu0 %v57
    %1103 = vmatprep.mubr.f32.mxu0 %v1026
    %1104 = vmatmul.mubr.f32.gmra.mxu0 %v1024
    %v1105 = vpop.f32.mrf.mxu0
    %v1106 = vadd.f32 0.0, %v1105
    %v1107 = vpop.f32.mrf.mxu0
    %1108 = vmatprep.mubr.f32.mxu0 %v1034
    %1109 = vmatmul.mubr.f32.gmra.mxu0 %v1032
    %v1110 = vpop.f32.mrf.mxu0
    %v1111 = vadd.f32 0.0, %v1110
    %v1112 = vpop.f32.mrf.mxu0
    %1113 = vdwg.mxu0
    %1114 = vmatprep.subr.mxu0 0.0
    %1115 = vmatpush1.msra.mxu0 %v88
    %1116 = vmatprep.subr.mxu0 0.0
    %1117 = vmatpush1.msra.mxu0 %v87
    %1118 = vmatprep.subr.mxu0 0.0
    %1119 = vmatpush1.msra.mxu0 %v86
    %1120 = vmatprep.subr.mxu0 0.0
    %1121 = vmatpush1.msra.mxu0 %v85
    %1122 = vmatprep.subr.mxu0 0.0
    %1123 = vmatpush1.msra.mxu0 %v84
    %1124 = vmatprep.subr.mxu0 0.0
    %1125 = vmatpush1.msra.mxu0 %v83
    %1126 = vmatprep.subr.mxu0 0.0
    %1127 = vmatpush1.msra.mxu0 %v82
    %1128 = vmatprep.subr.mxu0 0.0
    %1129 = vmatpush1.msra.mxu0 %v81
    %1130 = vmatprep.subr.mxu0 0.0
    %1131 = vmatpush1.msra.mxu0 %v80
    %1132 = vmatprep.subr.mxu0 0.0
    %1133 = vmatpush1.msra.mxu0 %v79
    %1134 = vmatprep.subr.mxu0 0.0
    %1135 = vmatpush1.msra.mxu0 %v78
    %1136 = vmatprep.subr.mxu0 0.0
    %1137 = vmatpush1.msra.mxu0 %v77
    %1138 = vmatprep.subr.mxu0 0.0
    %1139 = vmatpush1.msra.mxu0 %v76
    %1140 = vmatprep.subr.mxu0 0.0
    %1141 = vmatpush1.msra.mxu0 %v75
    %1142 = vmatprep.subr.mxu0 0.0
    %1143 = vmatpush1.msra.mxu0 %v74
    %1144 = vmatprep.subr.mxu0 0.0
    %1145 = vmatpush1.msra.mxu0 %v73
    %1146 = vmatprep.subr.mxu0 0.0
    %1147 = vmatpush2.msra.mxu0 %v104
    %1148 = vmatprep.subr.mxu0 0.0
    %1149 = vmatpush2.msra.mxu0 %v103
    %1150 = vmatprep.subr.mxu0 0.0
    %1151 = vmatpush2.msra.mxu0 %v102
    %1152 = vmatprep.subr.mxu0 0.0
    %1153 = vmatpush2.msra.mxu0 %v101
    %1154 = vmatprep.subr.mxu0 0.0
    %1155 = vmatpush2.msra.mxu0 %v100
    %1156 = vmatprep.subr.mxu0 0.0
    %1157 = vmatpush2.msra.mxu0 %v99
    %1158 = vmatprep.subr.mxu0 0.0
    %1159 = vmatpush2.msra.mxu0 %v98
    %1160 = vmatprep.subr.mxu0 0.0
    %1161 = vmatpush2.msra.mxu0 %v97
    %1162 = vmatprep.subr.mxu0 0.0
    %1163 = vmatpush2.msra.mxu0 %v96
    %1164 = vmatprep.subr.mxu0 0.0
    %1165 = vmatpush2.msra.mxu0 %v95
    %1166 = vmatprep.subr.mxu0 0.0
    %1167 = vmatpush2.msra.mxu0 %v94
    %1168 = vmatprep.subr.mxu0 0.0
    %1169 = vmatpush2.msra.mxu0 %v93
    %1170 = vmatprep.subr.mxu0 0.0
    %1171 = vmatpush2.msra.mxu0 %v92
    %1172 = vmatprep.subr.mxu0 0.0
    %1173 = vmatpush2.msra.mxu0 %v91
    %1174 = vmatprep.subr.mxu0 0.0
    %1175 = vmatpush2.msra.mxu0 %v90
    %1176 = vmatprep.subr.mxu0 0.0
    %1177 = vmatpush2.msra.mxu0 %v89
    %1178 = vmatprep.mubr.f32.mxu0 %v1030
    %1179 = vmatmul.mubr.f32.gmra.mxu0 %v1028
    %v1180 = vpop.f32.mrf.mxu0
    %v1181 = vadd.f32 %v1106, %v1180
    %v1182 = vpop.f32.mrf.mxu0
    %1183 = vmatprep.mubr.f32.mxu0 %v1038
    %1184 = vmatmul.mubr.f32.gmra.mxu0 %v1036
    %v1185 = vpop.f32.mrf.mxu0
    %v1186 = vadd.f32 %v1111, %v1185
    %v1187 = vpop.f32.mrf.mxu0
    %1188 = vdwg.mxu0
    %v1189 = vrcp.pop %v1181
    %v1190 = vrcp.pop %v1186
    %v1191 = vmul.f32 %v33, %v1024
    %v1192 = vmul.f32 %v34, %v1026
    %v1193 = vmul.f32 %v35, %v1028
    %v1194 = vmul.f32 %v36, %v1030
    %v1195 = vmul.f32 %v37, %v1032
    %v1196 = vmul.f32 %v38, %v1034
    %v1197 = vmul.f32 %v39, %v1036
    %v1198 = vmul.f32 %v40, %v1038
    %1199 = vmatprep.subr.mxu0 0.0
    %1200 = vmatpush1.msra.mxu0 %v56
    %1201 = vmatprep.subr.mxu0 0.0
    %1202 = vmatpush1.msra.mxu0 %v55
    %1203 = vmatprep.subr.mxu0 0.0
    %1204 = vmatpush1.msra.mxu0 %v54
    %1205 = vmatprep.subr.mxu0 0.0
    %1206 = vmatpush1.msra.mxu0 %v53
    %1207 = vmatprep.subr.mxu0 0.0
    %1208 = vmatpush1.msra.mxu0 %v52
    %1209 = vmatprep.subr.mxu0 0.0
    %1210 = vmatpush1.msra.mxu0 %v51
    %1211 = vmatprep.subr.mxu0 0.0
    %1212 = vmatpush1.msra.mxu0 %v50
    %1213 = vmatprep.subr.mxu0 0.0
    %1214 = vmatpush1.msra.mxu0 %v49
    %1215 = vmatprep.subr.mxu0 0.0
    %1216 = vmatpush1.msra.mxu0 %v48
    %1217 = vmatprep.subr.mxu0 0.0
    %1218 = vmatpush1.msra.mxu0 %v47
    %1219 = vmatprep.subr.mxu0 0.0
    %1220 = vmatpush1.msra.mxu0 %v46
    %1221 = vmatprep.subr.mxu0 0.0
    %1222 = vmatpush1.msra.mxu0 %v45
    %1223 = vmatprep.subr.mxu0 0.0
    %1224 = vmatpush1.msra.mxu0 %v44
    %1225 = vmatprep.subr.mxu0 0.0
    %1226 = vmatpush1.msra.mxu0 %v43
    %1227 = vmatprep.subr.mxu0 0.0
    %1228 = vmatpush1.msra.mxu0 %v42
    %1229 = vmatprep.subr.mxu0 0.0
    %1230 = vmatpush1.msra.mxu0 %v41
    %1231 = vmatprep.subr.mxu0 0.0
    %1232 = vmatpush2.msra.mxu0 %v72
    %1233 = vmatprep.subr.mxu0 0.0
    %1234 = vmatpush2.msra.mxu0 %v71
    %1235 = vmatprep.subr.mxu0 0.0
    %1236 = vmatpush2.msra.mxu0 %v70
    %1237 = vmatprep.subr.mxu0 0.0
    %1238 = vmatpush2.msra.mxu0 %v69
    %1239 = vmatprep.subr.mxu0 0.0
    %1240 = vmatpush2.msra.mxu0 %v68
    %1241 = vmatprep.subr.mxu0 0.0
    %1242 = vmatpush2.msra.mxu0 %v67
    %1243 = vmatprep.subr.mxu0 0.0
    %1244 = vmatpush2.msra.mxu0 %v66
    %1245 = vmatprep.subr.mxu0 0.0
    %1246 = vmatpush2.msra.mxu0 %v65
    %1247 = vmatprep.subr.mxu0 0.0
    %1248 = vmatpush2.msra.mxu0 %v64
    %1249 = vmatprep.subr.mxu0 0.0
    %1250 = vmatpush2.msra.mxu0 %v63
    %1251 = vmatprep.subr.mxu0 0.0
    %1252 = vmatpush2.msra.mxu0 %v62
    %1253 = vmatprep.subr.mxu0 0.0
    %1254 = vmatpush2.msra.mxu0 %v61
    %1255 = vmatprep.subr.mxu0 0.0
    %1256 = vmatpush2.msra.mxu0 %v60
    %1257 = vmatprep.subr.mxu0 0.0
    %1258 = vmatpush2.msra.mxu0 %v59
    %1259 = vmatprep.subr.mxu0 0.0
    %1260 = vmatpush2.msra.mxu0 %v58
    %1261 = vmatprep.subr.mxu0 0.0
    %1262 = vmatpush2.msra.mxu0 %v57
    %1263 = vmatprep.mubr.f32.mxu0 %v1192
    %1264 = vmatmul.mubr.f32.gmra.mxu0 %v1191
    %v1265 = vpop.f32.mrf.mxu0
    %v1266 = vadd.f32 0.0, %v1265
    %v1267 = vpop.f32.mrf.mxu0
    %1268 = vmatprep.mubr.f32.mxu0 %v1196
    %1269 = vmatmul.mubr.f32.gmra.mxu0 %v1195
    %v1270 = vpop.f32.mrf.mxu0
    %v1271 = vadd.f32 0.0, %v1270
    %v1272 = vpop.f32.mrf.mxu0
    %1273 = vdwg.mxu0
    %1274 = vmatprep.subr.mxu0 0.0
    %1275 = vmatpush1.msra.mxu0 %v88
    %1276 = vmatprep.subr.mxu0 0.0
    %1277 = vmatpush1.msra.mxu0 %v87
    %1278 = vmatprep.subr.mxu0 0.0
    %1279 = vmatpush1.msra.mxu0 %v86
    %1280 = vmatprep.subr.mxu0 0.0
    %1281 = vmatpush1.msra.mxu0 %v85
    %1282 = vmatprep.subr.mxu0 0.0
    %1283 = vmatpush1.msra.mxu0 %v84
    %1284 = vmatprep.subr.mxu0 0.0
    %1285 = vmatpush1.msra.mxu0 %v83
    %1286 = vmatprep.subr.mxu0 0.0
    %1287 = vmatpush1.msra.mxu0 %v82
    %1288 = vmatprep.subr.mxu0 0.0
    %1289 = vmatpush1.msra.mxu0 %v81
    %1290 = vmatprep.subr.mxu0 0.0
    %1291 = vmatpush1.msra.mxu0 %v80
    %1292 = vmatprep.subr.mxu0 0.0
    %1293 = vmatpush1.msra.mxu0 %v79
    %1294 = vmatprep.subr.mxu0 0.0
    %1295 = vmatpush1.msra.mxu0 %v78
    %1296 = vmatprep.subr.mxu0 0.0
    %1297 = vmatpush1.msra.mxu0 %v77
    %1298 = vmatprep.subr.mxu0 0.0
    %1299 = vmatpush1.msra.mxu0 %v76
    %1300 = vmatprep.subr.mxu0 0.0
    %1301 = vmatpush1.msra.mxu0 %v75
    %1302 = vmatprep.subr.mxu0 0.0
    %1303 = vmatpush1.msra.mxu0 %v74
    %1304 = vmatprep.subr.mxu0 0.0
    %1305 = vmatpush1.msra.mxu0 %v73
    %1306 = vmatprep.subr.mxu0 0.0
    %1307 = vmatpush2.msra.mxu0 %v104
    %1308 = vmatprep.subr.mxu0 0.0
    %1309 = vmatpush2.msra.mxu0 %v103
    %1310 = vmatprep.subr.mxu0 0.0
    %1311 = vmatpush2.msra.mxu0 %v102
    %1312 = vmatprep.subr.mxu0 0.0
    %1313 = vmatpush2.msra.mxu0 %v101
    %1314 = vmatprep.subr.mxu0 0.0
    %1315 = vmatpush2.msra.mxu0 %v100
    %1316 = vmatprep.subr.mxu0 0.0
    %1317 = vmatpush2.msra.mxu0 %v99
    %1318 = vmatprep.subr.mxu0 0.0
    %1319 = vmatpush2.msra.mxu0 %v98
    %1320 = vmatprep.subr.mxu0 0.0
    %1321 = vmatpush2.msra.mxu0 %v97
    %1322 = vmatprep.subr.mxu0 0.0
    %1323 = vmatpush2.msra.mxu0 %v96
    %1324 = vmatprep.subr.mxu0 0.0
    %1325 = vmatpush2.msra.mxu0 %v95
    %1326 = vmatprep.subr.mxu0 0.0
    %1327 = vmatpush2.msra.mxu0 %v94
    %1328 = vmatprep.subr.mxu0 0.0
    %1329 = vmatpush2.msra.mxu0 %v93
    %1330 = vmatprep.subr.mxu0 0.0
    %1331 = vmatpush2.msra.mxu0 %v92
    %1332 = vmatprep.subr.mxu0 0.0
    %1333 = vmatpush2.msra.mxu0 %v91
    %1334 = vmatprep.subr.mxu0 0.0
    %1335 = vmatpush2.msra.mxu0 %v90
    %1336 = vmatprep.subr.mxu0 0.0
    %1337 = vmatpush2.msra.mxu0 %v89
    %1338 = vmatprep.mubr.f32.mxu0 %v1194
    %1339 = vmatmul.mubr.f32.gmra.mxu0 %v1193
    %v1340 = vpop.f32.mrf.mxu0
    %v1341 = vadd.f32 %v1266, %v1340
    %v1342 = vpop.f32.mrf.mxu0
    %1343 = vmatprep.mubr.f32.mxu0 %v1198
    %1344 = vmatmul.mubr.f32.gmra.mxu0 %v1197
    %v1345 = vpop.f32.mrf.mxu0
    %v1346 = vadd.f32 %v1271, %v1345
    %v1347 = vpop.f32.mrf.mxu0
    %1348 = vdwg.mxu0
    %v1349 = vmul.f32 %v1341, %v1189
    %v1350 = vmul.f32 %v1346, %v1190
    %v1351 = vmul.f32 %v110, %v1024
    %v1352 = vmul.f32 %v111, %v1026
    %v1353 = vmul.f32 %v112, %v1028
    %v1354 = vmul.f32 %v113, %v1030
    %v1355 = vmul.f32 %v114, %v1032
    %v1356 = vmul.f32 %v115, %v1034
    %v1357 = vmul.f32 %v116, %v1036
    %v1358 = vmul.f32 %v117, %v1038
    %1359 = vmatprep.subr.mxu0 0.0
    %1360 = vmatpush1.msra.mxu0 %v56
    %1361 = vmatprep.subr.mxu0 0.0
    %1362 = vmatpush1.msra.mxu0 %v55
    %1363 = vmatprep.subr.mxu0 0.0
    %1364 = vmatpush1.msra.mxu0 %v54
    %1365 = vmatprep.subr.mxu0 0.0
    %1366 = vmatpush1.msra.mxu0 %v53
    %1367 = vmatprep.subr.mxu0 0.0
    %1368 = vmatpush1.msra.mxu0 %v52
    %1369 = vmatprep.subr.mxu0 0.0
    %1370 = vmatpush1.msra.mxu0 %v51
    %1371 = vmatprep.subr.mxu0 0.0
    %1372 = vmatpush1.msra.mxu0 %v50
    %1373 = vmatprep.subr.mxu0 0.0
    %1374 = vmatpush1.msra.mxu0 %v49
    %1375 = vmatprep.subr.mxu0 0.0
    %1376 = vmatpush1.msra.mxu0 %v48
    %1377 = vmatprep.subr.mxu0 0.0
    %1378 = vmatpush1.msra.mxu0 %v47
    %1379 = vmatprep.subr.mxu0 0.0
    %1380 = vmatpush1.msra.mxu0 %v46
    %1381 = vmatprep.subr.mxu0 0.0
    %1382 = vmatpush1.msra.mxu0 %v45
    %1383 = vmatprep.subr.mxu0 0.0
    %1384 = vmatpush1.msra.mxu0 %v44
    %1385 = vmatprep.subr.mxu0 0.0
    %1386 = vmatpush1.msra.mxu0 %v43
    %1387 = vmatprep.subr.mxu0 0.0
    %1388 = vmatpush1.msra.mxu0 %v42
    %1389 = vmatprep.subr.mxu0 0.0
    %1390 = vmatpush1.msra.mxu0 %v41
    %1391 = vmatprep.subr.mxu0 0.0
    %1392 = vmatpush2.msra.mxu0 %v72
    %1393 = vmatprep.subr.mxu0 0.0
    %1394 = vmatpush2.msra.mxu0 %v71
    %1395 = vmatprep.subr.mxu0 0.0
    %1396 = vmatpush2.msra.mxu0 %v70
    %1397 = vmatprep.subr.mxu0 0.0
    %1398 = vmatpush2.msra.mxu0 %v69
    %1399 = vmatprep.subr.mxu0 0.0
    %1400 = vmatpush2.msra.mxu0 %v68
    %1401 = vmatprep.subr.mxu0 0.0
    %1402 = vmatpush2.msra.mxu0 %v67
    %1403 = vmatprep.subr.mxu0 0.0
    %1404 = vmatpush2.msra.mxu0 %v66
    %1405 = vmatprep.subr.mxu0 0.0
    %1406 = vmatpush2.msra.mxu0 %v65
    %1407 = vmatprep.subr.mxu0 0.0
    %1408 = vmatpush2.msra.mxu0 %v64
    %1409 = vmatprep.subr.mxu0 0.0
    %1410 = vmatpush2.msra.mxu0 %v63
    %1411 = vmatprep.subr.mxu0 0.0
    %1412 = vmatpush2.msra.mxu0 %v62
    %1413 = vmatprep.subr.mxu0 0.0
    %1414 = vmatpush2.msra.mxu0 %v61
    %1415 = vmatprep.subr.mxu0 0.0
    %1416 = vmatpush2.msra.mxu0 %v60
    %1417 = vmatprep.subr.mxu0 0.0
    %1418 = vmatpush2.msra.mxu0 %v59
    %1419 = vmatprep.subr.mxu0 0.0
    %1420 = vmatpush2.msra.mxu0 %v58
    %1421 = vmatprep.subr.mxu0 0.0
    %1422 = vmatpush2.msra.mxu0 %v57
    %1423 = vmatprep.mubr.f32.mxu0 %v1352
    %1424 = vmatmul.mubr.f32.gmra.mxu0 %v1351
    %v1425 = vpop.f32.mrf.mxu0
    %v1426 = vadd.f32 0.0, %v1425
    %v1427 = vpop.f32.mrf.mxu0
    %1428 = vmatprep.mubr.f32.mxu0 %v1356
    %1429 = vmatmul.mubr.f32.gmra.mxu0 %v1355
    %v1430 = vpop.f32.mrf.mxu0
    %v1431 = vadd.f32 0.0, %v1430
    %v1432 = vpop.f32.mrf.mxu0
    %1433 = vdwg.mxu0
    %1434 = vmatprep.subr.mxu0 0.0
    %1435 = vmatpush1.msra.mxu0 %v88
    %1436 = vmatprep.subr.mxu0 0.0
    %1437 = vmatpush1.msra.mxu0 %v87
    %1438 = vmatprep.subr.mxu0 0.0
    %1439 = vmatpush1.msra.mxu0 %v86
    %1440 = vmatprep.subr.mxu0 0.0
    %1441 = vmatpush1.msra.mxu0 %v85
    %1442 = vmatprep.subr.mxu0 0.0
    %1443 = vmatpush1.msra.mxu0 %v84
    %1444 = vmatprep.subr.mxu0 0.0
    %1445 = vmatpush1.msra.mxu0 %v83
    %1446 = vmatprep.subr.mxu0 0.0
    %1447 = vmatpush1.msra.mxu0 %v82
    %1448 = vmatprep.subr.mxu0 0.0
    %1449 = vmatpush1.msra.mxu0 %v81
    %1450 = vmatprep.subr.mxu0 0.0
    %1451 = vmatpush1.msra.mxu0 %v80
    %1452 = vmatprep.subr.mxu0 0.0
    %1453 = vmatpush1.msra.mxu0 %v79
    %1454 = vmatprep.subr.mxu0 0.0
    %1455 = vmatpush1.msra.mxu0 %v78
    %1456 = vmatprep.subr.mxu0 0.0
    %1457 = vmatpush1.msra.mxu0 %v77
    %1458 = vmatprep.subr.mxu0 0.0
    %1459 = vmatpush1.msra.mxu0 %v76
    %1460 = vmatprep.subr.mxu0 0.0
    %1461 = vmatpush1.msra.mxu0 %v75
    %1462 = vmatprep.subr.mxu0 0.0
    %1463 = vmatpush1.msra.mxu0 %v74
    %1464 = vmatprep.subr.mxu0 0.0
    %1465 = vmatpush1.msra.mxu0 %v73
    %1466 = vmatprep.subr.mxu0 0.0
    %1467 = vmatpush2.msra.mxu0 %v104
    %1468 = vmatprep.subr.mxu0 0.0
    %1469 = vmatpush2.msra.mxu0 %v103
    %1470 = vmatprep.subr.mxu0 0.0
    %1471 = vmatpush2.msra.mxu0 %v102
    %1472 = vmatprep.subr.mxu0 0.0
    %1473 = vmatpush2.msra.mxu0 %v101
    %1474 = vmatprep.subr.mxu0 0.0
    %1475 = vmatpush2.msra.mxu0 %v100
    %1476 = vmatprep.subr.mxu0 0.0
    %1477 = vmatpush2.msra.mxu0 %v99
    %1478 = vmatprep.subr.mxu0 0.0
    %1479 = vmatpush2.msra.mxu0 %v98
    %1480 = vmatprep.subr.mxu0 0.0
    %1481 = vmatpush2.msra.mxu0 %v97
    %1482 = vmatprep.subr.mxu0 0.0
    %1483 = vmatpush2.msra.mxu0 %v96
    %1484 = vmatprep.subr.mxu0 0.0
    %1485 = vmatpush2.msra.mxu0 %v95
    %1486 = vmatprep.subr.mxu0 0.0
    %1487 = vmatpush2.msra.mxu0 %v94
    %1488 = vmatprep.subr.mxu0 0.0
    %1489 = vmatpush2.msra.mxu0 %v93
    %1490 = vmatprep.subr.mxu0 0.0
    %1491 = vmatpush2.msra.mxu0 %v92
    %1492 = vmatprep.subr.mxu0 0.0
    %1493 = vmatpush2.msra.mxu0 %v91
    %1494 = vmatprep.subr.mxu0 0.0
    %1495 = vmatpush2.msra.mxu0 %v90
    %1496 = vmatprep.subr.mxu0 0.0
    %1497 = vmatpush2.msra.mxu0 %v89
    %1498 = vmatprep.mubr.f32.mxu0 %v1354
    %1499 = vmatmul.mubr.f32.gmra.mxu0 %v1353
    %v1500 = vpop.f32.mrf.mxu0
    %v1501 = vadd.f32 %v1426, %v1500
    %v1502 = vpop.f32.mrf.mxu0
    %1503 = vmatprep.mubr.f32.mxu0 %v1358
    %1504 = vmatmul.mubr.f32.gmra.mxu0 %v1357
    %v1505 = vpop.f32.mrf.mxu0
    %v1506 = vadd.f32 %v1431, %v1505
    %v1507 = vpop.f32.mrf.mxu0
    %1508 = vdwg.mxu0
    %v1509 = vmul.f32 %v1501, %v1189
    %v1510 = vmul.f32 %v1506, %v1190
    %v1511 = vmul.f32 %v1349, %v1349
    %v1512 = vmul.f32 %v1350, %v1350
    %v1513 = vsub.f32 %v1509, %v1511
    %v1514 = vsub.f32 %v1510, %v1512
    %v1515 = vmax.f32 %v1513, 0.0001
    %v1516 = vmax.f32 %v1514, 0.0001
    %v1517 = vrsqrt.pop %v1515
    %v1518 = vmul.f32 %v1515, %v1517
    %vm1519 = vcmp.eq.f32.partialorder %v1515, inf
    %v1520 = vsel %vm1519, %v1515, %v1518
    %vm1521 = vcmp.eq.f32.partialorder %v1515, 0.0
    %v1522 = vand.u32 %v1515, 2147483648
    %v1523 = vsel %vm1521, %v1522, %v1520
    %v1524 = vrsqrt.pop %v1516
    %v1525 = vmul.f32 %v1516, %v1524
    %vm1526 = vcmp.eq.f32.partialorder %v1516, inf
    %v1527 = vsel %vm1526, %v1516, %v1525
    %vm1528 = vcmp.eq.f32.partialorder %v1516, 0.0
    %v1529 = vand.u32 %v1516, 2147483648
    %v1530 = vsel %vm1528, %v1529, %v1527
    %1531 = vxpose.xlu0.b32.start [1/16] %v1349, 128
    %1532 = vxpose.xlu0.b32.cont [2/16] %v1350, 128
    %1533 = vxpose.xlu0.b32.cont [3/16] %v1523, 128
    %1534 = vxpose.xlu0.b32.cont [4/16] %v1530, 128
    %1535 = vxpose.xlu0.b32.cont [5/16] 0.0, 128
    %1536 = vxpose.xlu0.b32.cont [6/16] 0.0, 128
    %1537 = vxpose.xlu0.b32.cont [7/16] 0.0, 128
    %1538 = vxpose.xlu0.b32.cont [8/16] 0.0, 128
    %1539 = vxpose.xlu0.b32.cont [9/16] 0.0, 128
    %1540 = vxpose.xlu0.b32.cont [10/16] 0.0, 128
    %1541 = vxpose.xlu0.b32.cont [11/16] 0.0, 128
    %1542 = vxpose.xlu0.b32.cont [12/16] 0.0, 128
    %1543 = vxpose.xlu0.b32.cont [13/16] 0.0, 128
    %1544 = vxpose.xlu0.b32.cont [14/16] 0.0, 128
    %1545 = vxpose.xlu0.b32.cont [15/16] 0.0, 128
    %1546 = vxpose.xlu0.b32.end [16/16] 0.0, 128
    %v1547 = vpop.trf.xlu0
    %v1548 = vpop.trf.xlu0
    %v1549 = vpop.trf.xlu0
    %v1550 = vpop.trf.xlu0
    %v1551 = vpop.trf.xlu0
    %v1552 = vpop.trf.xlu0
    %v1553 = vpop.trf.xlu0
    %v1554 = vpop.trf.xlu0
    %v1555 = vpop.trf.xlu0
    %v1556 = vpop.trf.xlu0
    %v1557 = vpop.trf.xlu0
    %v1558 = vpop.trf.xlu0
    %v1559 = vpop.trf.xlu0
    %v1560 = vpop.trf.xlu0
    %v1561 = vpop.trf.xlu0
    %v1562 = vpop.trf.xlu0
    %v1563 = vld [vmem:[%s7] sm:$0xff]
    %v1564 = vld [vmem:[%s7 + $0x8] sm:$0xff]
    %v1565 = vld [vmem:[%s7 + $0x10] sm:$0xff]
    %v1566 = vld [vmem:[%s7 + $0x18] sm:$0xff]
    %v1567 = vld [vmem:[%s8] sm:$0x1]
    %v1569 = vlaneseq
    %v1570 = vshrl.u32 %v1569, 7
    %v1571 = vsub.s32 0, %v1570
    %v1572 = vrot.slane %v1567, %v1571
    %v1575 = vsel %vm448, %v1547, 0
    %1577 = vmatprep.subr.mxu0 0.0
    %1578 = vmatpush1.msra.mxu0 0.0
    %1579 = vmatprep.subr.mxu0 0.0
    %1580 = vmatpush1.msra.mxu0 0.0
    %1581 = vmatprep.subr.mxu0 0.0
    %1582 = vmatpush1.msra.mxu0 0.0
    %1583 = vmatprep.subr.mxu0 0.0
    %1584 = vmatpush1.msra.mxu0 0.0
    %1585 = vmatprep.subr.mxu0 0.0
    %1586 = vmatpush1.msra.mxu0 0.0
    %1587 = vmatprep.subr.mxu0 0.0
    %1588 = vmatpush1.msra.mxu0 0.0
    %1589 = vmatprep.subr.mxu0 0.0
    %1590 = vmatpush1.msra.mxu0 0.0
    %1591 = vmatprep.subr.mxu0 0.0
    %1592 = vmatpush1.msra.mxu0 0.0
    %1593 = vmatprep.subr.mxu0 0.0
    %1594 = vmatpush1.msra.mxu0 0.0
    %1595 = vmatprep.subr.mxu0 0.0
    %1596 = vmatpush1.msra.mxu0 0.0
    %1597 = vmatprep.subr.mxu0 0.0
    %1598 = vmatpush1.msra.mxu0 0.0
    %1599 = vmatprep.subr.mxu0 0.0
    %1600 = vmatpush1.msra.mxu0 0.0
    %1601 = vmatprep.subr.mxu0 0.0
    %1602 = vmatpush1.msra.mxu0 %v1566
    %1603 = vmatprep.subr.mxu0 0.0
    %1604 = vmatpush1.msra.mxu0 %v1565
    %1605 = vmatprep.subr.mxu0 0.0
    %1606 = vmatpush1.msra.mxu0 %v1564
    %1607 = vmatprep.subr.mxu0 0.0
    %1608 = vmatpush1.msra.mxu0 %v1563
    %1609 = vmatprep.subr.mxu0 0.0
    %1610 = vmatpush2.msra.mxu0 0.0
    %1611 = vmatprep.subr.mxu0 0.0
    %1612 = vmatpush2.msra.mxu0 0.0
    %1613 = vmatprep.subr.mxu0 0.0
    %1614 = vmatpush2.msra.mxu0 0.0
    %1615 = vmatprep.subr.mxu0 0.0
    %1616 = vmatpush2.msra.mxu0 0.0
    %1617 = vmatprep.subr.mxu0 0.0
    %1618 = vmatpush2.msra.mxu0 0.0
    %1619 = vmatprep.subr.mxu0 0.0
    %1620 = vmatpush2.msra.mxu0 0.0
    %1621 = vmatprep.subr.mxu0 0.0
    %1622 = vmatpush2.msra.mxu0 0.0
    %1623 = vmatprep.subr.mxu0 0.0
    %1624 = vmatpush2.msra.mxu0 0.0
    %1625 = vmatprep.subr.mxu0 0.0
    %1626 = vmatpush2.msra.mxu0 0.0
    %1627 = vmatprep.subr.mxu0 0.0
    %1628 = vmatpush2.msra.mxu0 0.0
    %1629 = vmatprep.subr.mxu0 0.0
    %1630 = vmatpush2.msra.mxu0 0.0
    %1631 = vmatprep.subr.mxu0 0.0
    %1632 = vmatpush2.msra.mxu0 0.0
    %1633 = vmatprep.subr.mxu0 0.0
    %1634 = vmatpush2.msra.mxu0 0.0
    %1635 = vmatprep.subr.mxu0 0.0
    %1636 = vmatpush2.msra.mxu0 0.0
    %1637 = vmatprep.subr.mxu0 0.0
    %1638 = vmatpush2.msra.mxu0 0.0
    %1639 = vmatprep.subr.mxu0 0.0
    %1640 = vmatpush2.msra.mxu0 0.0
    %1641 = vmatprep.mubr.f32.mxu0 0.0
    %1642 = vmatmul.mubr.f32.gmra.mxu0 %v1575
    %v1643 = vpop.f32.mrf.mxu0
    %v1644 = vadd.f32 %v1572, %v1643
    %v1645 = vpop.f32.mrf.mxu0
    %1646 = vdwg.mxu0
    %1647 = vst [vmem:[#allocation2] sm:$0xf] %v1644
    // Predicated region
    $region38: #{tpu_custom_call.1} parent=1 // pred_check
      _
    $region39: #{tpu_custom_call.1} parent=1 // pred_check_branch
      %1649 = sbr.rel (0) target = $region41
    $region40: #{tpu_custom_call.1} parent=1 // pred_region
      %s1651 = ssub.s32 64, 64
      %1652 = vsyncadd [#allocation3], %s1651
      %s1654 = sshll.u32 [#allocation2], 4
      %s1655 = int_to_ptr.vmem [resolvable:$true] %s1654
      %1657 = dma.vmem_to_hbm [thread:$0]  %s1655, 64, %s9, [#allocation3]
    $region41: #{tpu_custom_call.1} parent=1 // pred_fallthru
      _
    // Predicated region
    $region42: #{tpu_custom_call.1} parent=1 // pred_check
      _
    $region43: #{tpu_custom_call.1} parent=1 // pred_check_branch
      %1659 = sbr.rel (0) target = $region45
    $region44: #{tpu_custom_call.1} parent=1 // pred_region
      %1660 = dma.done [#allocation3], 64
    $region45: #{tpu_custom_call.1} parent=1 // pred_fallthru
      _
    %1661 = vsyncpa [#allocation3], 1

</llo_original>
